<compile_context>
chip_gen: v5e
topology: v5e:2x2
jax: 0.10.0
libtpu: 0.0.40
codegen_flags: <defaults>
</compile_context>

<pallas_src>
import functools

import jax
import jax.numpy as jnp
from jax.experimental import pallas as pl
from jax.experimental.pallas import tpu as pltpu  # noqa: F401  (TPU backend / CompilerParams if scaled up)


def _make_lstm_kernel(num_layers, hidden_dim, seq_len, batch_pad):
    H, L, T, Bp = hidden_dim, num_layers, seq_len, batch_pad

    def kernel(*refs):
        # refs layout:
        #   [0]                x_ref   (T*Bp, D)  time-major rows (t*Bp + b)
        #   [1 + 3l + 0]       w_ih_l  (D_in, 4H)   gate cols packed [i,f,o,g]
        #   [1 + 3l + 1]       w_hh_l  (H,   4H)
        #   [1 + 3l + 2]       b_l     (1,   4H)    (= b_ih + b_hh)
        #   [1 + 3L]           w_fc    (H, O)
        #   [2 + 3L]           b_fc    (1, O)
        #   [3 + 3L]           out_ref (Bp, O)
        x_ref = refs[0]
        layer_refs = refs[1:1 + 3 * L]
        w_fc_ref = refs[1 + 3 * L]
        b_fc_ref = refs[2 + 3 * L]
        out_ref = refs[3 + 3 * L]

        # ---- Phase 1: hoisted layer-0 input projection for ALL timesteps ----
        # One well-shaped matmul instead of T tiny ones; layer-0 bias folded in
        # here (single broadcast in the whole trace).
        gx0 = (jnp.dot(x_ref[...], layer_refs[0][...],
                       preferred_element_type=jnp.float32)
               + layer_refs[2][...])                      # (T*Bp, 4H)

        # ---- Hoist weight loads / bias broadcasts out of the time loop ------
        w_hh = [layer_refs[3 * l + 1][...] for l in range(L)]
        w_ih = [None] + [layer_refs[3 * l][...] for l in range(1, L)]
        b_full = [None] + [jnp.broadcast_to(layer_refs[3 * l + 2][...],
                                            (Bp, 4 * H)) for l in range(1, L)]

        h = [jnp.zeros((Bp, H), jnp.float32) for _ in range(L)]
        c = [jnp.zeros((Bp, H), jnp.float32) for _ in range(L)]

        def cell(gates, c_prev):
            # Gate columns are packed [i, f, o, g]: one sigmoid over the
            # contiguous 3H lanes, one tanh over the trailing H lanes.
            sig = jax.nn.sigmoid(gates[:, :3 * H])
            i_g = sig[:, 0 * H:1 * H]
            f_g = sig[:, 1 * H:2 * H]
            o_g = sig[:, 2 * H:3 * H]
            g_g = jnp.tanh(gates[:, 3 * H:])
            c_new = f_g * c_prev + i_g * g_g
            h_new = o_g * jnp.tanh(c_new)
            return h_new, c_new

        # Static T -> fully unrolled; every slice below is static and
        # tile-aligned (Bp rows = one f32 sublane tile).
        for t in range(T):
            gates0 = gx0[t * Bp:(t + 1) * Bp, :] + jnp.dot(
                h[0], w_hh[0], preferred_element_type=jnp.float32)
            h[0], c[0] = cell(gates0, c[0])
            for l in range(1, L):
                gates = (jnp.dot(h[l - 1], w_ih[l],
                                 preferred_element_type=jnp.float32)
                         + jnp.dot(h[l], w_hh[l],
                                   preferred_element_type=jnp.float32)
                         + b_full[l])
                h[l], c[l] = cell(gates, c[l])

        # Final Linear on the last timestep's top-layer hidden state.
        out_ref[...] = (jnp.dot(h[L - 1], w_fc_ref[...],
                                preferred_element_type=jnp.float32)
                        + b_fc_ref[...]).astype(out_ref.dtype)

    return kernel


@functools.partial(jax.jit, static_argnames=("hidden_dim", "num_layers",
                                             "output_dim"))
def lstm_model_forward(x, layer_params, w_fc, b_fc, *,
                       hidden_dim, num_layers, output_dim):
    """x: (B, T, D) float32, batch-first like the PyTorch module."""
    B, T, D = x.shape
    H, L, O = hidden_dim, num_layers, output_dim

    # Pad batch to a sublane multiple (8 for f32); padded rows are discarded.
    Bp = ((B + 7) // 8) * 8
    x_p = jnp.pad(x, ((0, Bp - B), (0, 0), (0, 0)))
    # Time-major flattened rows (index = t*Bp + b): the per-timestep slice of
    # the precomputed layer-0 gates is then a contiguous block of Bp rows.
    x_tm = jnp.transpose(x_p, (1, 0, 2)).reshape(T * Bp, D)

    def reorder_ifgo_to_ifog(w):
        i, f, g, o = jnp.split(w, 4, axis=-1)
        return jnp.concatenate([i, f, o, g], axis=-1)

    flat_params = []
    for (w_ih, w_hh, b) in layer_params:
        flat_params += [reorder_ifgo_to_ifog(w_ih),
                        reorder_ifgo_to_ifog(w_hh),
                        reorder_ifgo_to_ifog(b)]
    flat_params += [w_fc, b_fc]

    kernel = _make_lstm_kernel(L, H, T, Bp)

    out = pl.pallas_call(
        kernel,
        out_shape=jax.ShapeDtypeStruct((Bp, O), jnp.float32),
        # No grid: single invocation, whole arrays live in VMEM once
        # (single-buffered); the time/layer recurrence is unrolled in-kernel.
    )(x_tm, *flat_params)
    return out[:B]


def lstm_model_reference(x, layer_params, w_fc, b_fc, hidden_dim, num_layers):
    """Pure-JAX reference matching PyTorch nn.LSTM semantics (gate order ifgo)."""
    B, T, _ = x.shape
    H, L = hidden_dim, num_layers
    h = [jnp.zeros((B, H), jnp.float32) for _ in range(L)]
    c = [jnp.zeros((B, H), jnp.float32) for _ in range(L)]
    for t in range(T):
        inp = x[:, t, :]
        for l in range(L):
            w_ih, w_hh, b = layer_params[l]
            gates = inp @ w_ih + h[l] @ w_hh + b
            i_g = jax.nn.sigmoid(gates[:, 0 * H:1 * H])
            f_g = jax.nn.sigmoid(gates[:, 1 * H:2 * H])
            g_g = jnp.tanh(gates[:, 2 * H:3 * H])
            o_g = jax.nn.sigmoid(gates[:, 3 * H:4 * H])
            c[l] = f_g * c[l] + i_g * g_g
            h[l] = o_g * jnp.tanh(c[l])
            inp = h[l]
    return h[-1] @ w_fc + b_fc


if __name__ == "__main__":
    # Small shapes consistent with the module's forward.
    B, T = 2, 8            # batch, sequence length
    D, H = 8, 32           # input_dim, hidden_dim
    L, O = 2, 4            # num_layers, output_dim

    key = jax.random.PRNGKey(0)
    scale = 1.0 / jnp.sqrt(H)

    layer_params = []
    for l in range(L):
        in_dim = D if l == 0 else H
        key, k1, k2, k3, k4 = jax.random.split(key, 5)
        # Stored pre-transposed for right-multiplication: x @ W_ih^T == x @ w_ih
        w_ih = jax.random.uniform(k1, (in_dim, 4 * H), jnp.float32,
                                  -scale, scale)
        w_hh = jax.random.uniform(k2, (H, 4 * H), jnp.float32, -scale, scale)
        b_ih = jax.random.uniform(k3, (1, 4 * H), jnp.float32, -scale, scale)
        b_hh = jax.random.uniform(k4, (1, 4 * H), jnp.float32, -scale, scale)
        layer_params.append((w_ih, w_hh, b_ih + b_hh))

    key, k5, k6, kx = jax.random.split(key, 4)
    w_fc = jax.random.uniform(k5, (H, O), jnp.float32, -scale, scale)
    b_fc = jax.random.uniform(k6, (1, O), jnp.float32, -scale, scale)

    x = jax.random.normal(kx, (B, T, D), jnp.float32)

    out = lstm_model_forward(x, tuple(layer_params), w_fc, b_fc,
                             hidden_dim=H, num_layers=L, output_dim=O)
    out = jax.block_until_ready(out)

    ref = lstm_model_reference(x, layer_params, w_fc, b_fc, H, L)
    assert out.shape == (B, O)
    assert jnp.allclose(out, ref, atol=3e-5, rtol=3e-5), (out, ref)

    print("KERNEL_OK")
</pallas_src>

<mosaic_0001>
module attributes {stable_mosaic.version = 11 : i64} {
  func.func @kernel(%arg0: memref<64x8xf32, #tpu.memory_space<vmem>>, %arg1: memref<8x128xf32, #tpu.memory_space<vmem>>, %arg2: memref<32x128xf32, #tpu.memory_space<vmem>>, %arg3: memref<1x128xf32, #tpu.memory_space<vmem>>, %arg4: memref<32x128xf32, #tpu.memory_space<vmem>>, %arg5: memref<32x128xf32, #tpu.memory_space<vmem>>, %arg6: memref<1x128xf32, #tpu.memory_space<vmem>>, %arg7: memref<32x4xf32, #tpu.memory_space<vmem>>, %arg8: memref<1x4xf32, #tpu.memory_space<vmem>>, %arg9: memref<8x4xf32, #tpu.memory_space<vmem>>) attributes {dimension_semantics = [], scalar_prefetch = 0 : i64, scratch_operands = 0 : i64, tpu.core_type = #tpu.core_type<tc>} {
    %c0 = arith.constant 0 : index
    %c0_0 = arith.constant 0 : index
    %0 = vector.load %arg0[%c0, %c0_0] : memref<64x8xf32, #tpu.memory_space<vmem>>, vector<64x8xf32>
    %c0_1 = arith.constant 0 : index
    %c0_2 = arith.constant 0 : index
    %1 = vector.load %arg1[%c0_1, %c0_2] : memref<8x128xf32, #tpu.memory_space<vmem>>, vector<8x128xf32>
    %cst = arith.constant dense<0.000000e+00> : vector<64x128xf32>
    %2 = tpu.matmul %0, %1, %cst {dimension_numbers = #tpu.dot_dimension_numbers<[1], [0], [0], [1], [0, 0, 1, 1], [], []>} : vector<64x8xf32>, vector<8x128xf32>, vector<64x128xf32> -> vector<64x128xf32>
    %c0_3 = arith.constant 0 : index
    %c0_4 = arith.constant 0 : index
    %3 = vector.load %arg3[%c0_3, %c0_4] : memref<1x128xf32, #tpu.memory_space<vmem>>, vector<1x128xf32>
    %4 = vector.broadcast %3 : vector<1x128xf32> to vector<64x128xf32>
    %5 = arith.addf %2, %4 : vector<64x128xf32>
    %c0_5 = arith.constant 0 : index
    %c0_6 = arith.constant 0 : index
    %6 = vector.load %arg2[%c0_5, %c0_6] : memref<32x128xf32, #tpu.memory_space<vmem>>, vector<32x128xf32>
    %c0_7 = arith.constant 0 : index
    %c0_8 = arith.constant 0 : index
    %7 = vector.load %arg5[%c0_7, %c0_8] : memref<32x128xf32, #tpu.memory_space<vmem>>, vector<32x128xf32>
    %c0_9 = arith.constant 0 : index
    %c0_10 = arith.constant 0 : index
    %8 = vector.load %arg4[%c0_9, %c0_10] : memref<32x128xf32, #tpu.memory_space<vmem>>, vector<32x128xf32>
    %c0_11 = arith.constant 0 : index
    %c0_12 = arith.constant 0 : index
    %9 = vector.load %arg6[%c0_11, %c0_12] : memref<1x128xf32, #tpu.memory_space<vmem>>, vector<1x128xf32>
    %10 = vector.shape_cast %9 : vector<1x128xf32> to vector<1x128xf32>
    %11 = vector.broadcast %10 : vector<1x128xf32> to vector<8x128xf32>
    %cst_13 = arith.constant 0.000000e+00 : f32
    %12 = vector.broadcast %cst_13 : f32 to vector<8x32xf32>
    %cst_14 = arith.constant 0.000000e+00 : f32
    %13 = vector.broadcast %cst_14 : f32 to vector<8x32xf32>
    %cst_15 = arith.constant 0.000000e+00 : f32
    %14 = vector.broadcast %cst_15 : f32 to vector<8x32xf32>
    %cst_16 = arith.constant 0.000000e+00 : f32
    %15 = vector.broadcast %cst_16 : f32 to vector<8x32xf32>
    %16 = vector.extract_strided_slice %5 {offsets = [0, 0], sizes = [8, 128], strides = [1, 1]} : vector<64x128xf32> to vector<8x128xf32>
    %cst_17 = arith.constant dense<0.000000e+00> : vector<8x128xf32>
    %17 = tpu.matmul %12, %6, %cst_17 {dimension_numbers = #tpu.dot_dimension_numbers<[1], [0], [0], [1], [0, 0, 1, 1], [], []>} : vector<8x32xf32>, vector<32x128xf32>, vector<8x128xf32> -> vector<8x128xf32>
    %18 = arith.addf %16, %17 : vector<8x128xf32>
    %19 = vector.extract_strided_slice %18 {offsets = [0, 0], sizes = [8, 96], strides = [1, 1]} : vector<8x128xf32> to vector<8x96xf32>
    %20 = arith.negf %19 : vector<8x96xf32>
    %21 = math.exp %20 : vector<8x96xf32>
    %cst_18 = arith.constant 1.000000e+00 : f32
    %22 = vector.broadcast %cst_18 : f32 to vector<8x96xf32>
    %23 = arith.addf %22, %21 : vector<8x96xf32>
    %24 = arith.divf %22, %23 : vector<8x96xf32>
    %25 = vector.extract_strided_slice %24 {offsets = [0, 0], sizes = [8, 32], strides = [1, 1]} : vector<8x96xf32> to vector<8x32xf32>
    %26 = vector.extract_strided_slice %24 {offsets = [0, 32], sizes = [8, 32], strides = [1, 1]} : vector<8x96xf32> to vector<8x32xf32>
    %27 = vector.extract_strided_slice %24 {offsets = [0, 64], sizes = [8, 32], strides = [1, 1]} : vector<8x96xf32> to vector<8x32xf32>
    %28 = vector.extract_strided_slice %18 {offsets = [0, 96], sizes = [8, 32], strides = [1, 1]} : vector<8x128xf32> to vector<8x32xf32>
    %29 = math.tanh %28 : vector<8x32xf32>
    %30 = arith.mulf %26, %14 : vector<8x32xf32>
    %31 = arith.mulf %25, %29 : vector<8x32xf32>
    %32 = arith.addf %30, %31 : vector<8x32xf32>
    %33 = math.tanh %32 : vector<8x32xf32>
    %34 = arith.mulf %27, %33 : vector<8x32xf32>
    %cst_19 = arith.constant dense<0.000000e+00> : vector<8x128xf32>
    %35 = tpu.matmul %34, %8, %cst_19 {dimension_numbers = #tpu.dot_dimension_numbers<[1], [0], [0], [1], [0, 0, 1, 1], [], []>} : vector<8x32xf32>, vector<32x128xf32>, vector<8x128xf32> -> vector<8x128xf32>
    %cst_20 = arith.constant dense<0.000000e+00> : vector<8x128xf32>
    %36 = tpu.matmul %13, %7, %cst_20 {dimension_numbers = #tpu.dot_dimension_numbers<[1], [0], [0], [1], [0, 0, 1, 1], [], []>} : vector<8x32xf32>, vector<32x128xf32>, vector<8x128xf32> -> vector<8x128xf32>
    %37 = arith.addf %35, %36 : vector<8x128xf32>
    %38 = arith.addf %37, %11 : vector<8x128xf32>
    %39 = vector.extract_strided_slice %38 {offsets = [0, 0], sizes = [8, 96], strides = [1, 1]} : vector<8x128xf32> to vector<8x96xf32>
    %40 = arith.negf %39 : vector<8x96xf32>
    %41 = math.exp %40 : vector<8x96xf32>
    %cst_21 = arith.constant 1.000000e+00 : f32
    %42 = vector.broadcast %cst_21 : f32 to vector<8x96xf32>
    %43 = arith.addf %42, %41 : vector<8x96xf32>
    %44 = arith.divf %42, %43 : vector<8x96xf32>
    %45 = vector.extract_strided_slice %44 {offsets = [0, 0], sizes = [8, 32], strides = [1, 1]} : vector<8x96xf32> to vector<8x32xf32>
    %46 = vector.extract_strided_slice %44 {offsets = [0, 32], sizes = [8, 32], strides = [1, 1]} : vector<8x96xf32> to vector<8x32xf32>
    %47 = vector.extract_strided_slice %44 {offsets = [0, 64], sizes = [8, 32], strides = [1, 1]} : vector<8x96xf32> to vector<8x32xf32>
    %48 = vector.extract_strided_slice %38 {offsets = [0, 96], sizes = [8, 32], strides = [1, 1]} : vector<8x128xf32> to vector<8x32xf32>
    %49 = math.tanh %48 : vector<8x32xf32>
    %50 = arith.mulf %46, %15 : vector<8x32xf32>
    %51 = arith.mulf %45, %49 : vector<8x32xf32>
    %52 = arith.addf %50, %51 : vector<8x32xf32>
    %53 = math.tanh %52 : vector<8x32xf32>
    %54 = arith.mulf %47, %53 : vector<8x32xf32>
    %55 = vector.extract_strided_slice %5 {offsets = [8, 0], sizes = [8, 128], strides = [1, 1]} : vector<64x128xf32> to vector<8x128xf32>
    %cst_22 = arith.constant dense<0.000000e+00> : vector<8x128xf32>
    %56 = tpu.matmul %34, %6, %cst_22 {dimension_numbers = #tpu.dot_dimension_numbers<[1], [0], [0], [1], [0, 0, 1, 1], [], []>} : vector<8x32xf32>, vector<32x128xf32>, vector<8x128xf32> -> vector<8x128xf32>
    %57 = arith.addf %55, %56 : vector<8x128xf32>
    %58 = vector.extract_strided_slice %57 {offsets = [0, 0], sizes = [8, 96], strides = [1, 1]} : vector<8x128xf32> to vector<8x96xf32>
    %59 = arith.negf %58 : vector<8x96xf32>
    %60 = math.exp %59 : vector<8x96xf32>
    %cst_23 = arith.constant 1.000000e+00 : f32
    %61 = vector.broadcast %cst_23 : f32 to vector<8x96xf32>
    %62 = arith.addf %61, %60 : vector<8x96xf32>
    %63 = arith.divf %61, %62 : vector<8x96xf32>
    %64 = vector.extract_strided_slice %63 {offsets = [0, 0], sizes = [8, 32], strides = [1, 1]} : vector<8x96xf32> to vector<8x32xf32>
    %65 = vector.extract_strided_slice %63 {offsets = [0, 32], sizes = [8, 32], strides = [1, 1]} : vector<8x96xf32> to vector<8x32xf32>
    %66 = vector.extract_strided_slice %63 {offsets = [0, 64], sizes = [8, 32], strides = [1, 1]} : vector<8x96xf32> to vector<8x32xf32>
    %67 = vector.extract_strided_slice %57 {offsets = [0, 96], sizes = [8, 32], strides = [1, 1]} : vector<8x128xf32> to vector<8x32xf32>
    %68 = math.tanh %67 : vector<8x32xf32>
    %69 = arith.mulf %65, %32 : vector<8x32xf32>
    %70 = arith.mulf %64, %68 : vector<8x32xf32>
    %71 = arith.addf %69, %70 : vector<8x32xf32>
    %72 = math.tanh %71 : vector<8x32xf32>
    %73 = arith.mulf %66, %72 : vector<8x32xf32>
    %cst_24 = arith.constant dense<0.000000e+00> : vector<8x128xf32>
    %74 = tpu.matmul %73, %8, %cst_24 {dimension_numbers = #tpu.dot_dimension_numbers<[1], [0], [0], [1], [0, 0, 1, 1], [], []>} : vector<8x32xf32>, vector<32x128xf32>, vector<8x128xf32> -> vector<8x128xf32>
    %cst_25 = arith.constant dense<0.000000e+00> : vector<8x128xf32>
    %75 = tpu.matmul %54, %7, %cst_25 {dimension_numbers = #tpu.dot_dimension_numbers<[1], [0], [0], [1], [0, 0, 1, 1], [], []>} : vector<8x32xf32>, vector<32x128xf32>, vector<8x128xf32> -> vector<8x128xf32>
    %76 = arith.addf %74, %75 : vector<8x128xf32>
    %77 = arith.addf %76, %11 : vector<8x128xf32>
    %78 = vector.extract_strided_slice %77 {offsets = [0, 0], sizes = [8, 96], strides = [1, 1]} : vector<8x128xf32> to vector<8x96xf32>
    %79 = arith.negf %78 : vector<8x96xf32>
    %80 = math.exp %79 : vector<8x96xf32>
    %cst_26 = arith.constant 1.000000e+00 : f32
    %81 = vector.broadcast %cst_26 : f32 to vector<8x96xf32>
    %82 = arith.addf %81, %80 : vector<8x96xf32>
    %83 = arith.divf %81, %82 : vector<8x96xf32>
    %84 = vector.extract_strided_slice %83 {offsets = [0, 0], sizes = [8, 32], strides = [1, 1]} : vector<8x96xf32> to vector<8x32xf32>
    %85 = vector.extract_strided_slice %83 {offsets = [0, 32], sizes = [8, 32], strides = [1, 1]} : vector<8x96xf32> to vector<8x32xf32>
    %86 = vector.extract_strided_slice %83 {offsets = [0, 64], sizes = [8, 32], strides = [1, 1]} : vector<8x96xf32> to vector<8x32xf32>
    %87 = vector.extract_strided_slice %77 {offsets = [0, 96], sizes = [8, 32], strides = [1, 1]} : vector<8x128xf32> to vector<8x32xf32>
    %88 = math.tanh %87 : vector<8x32xf32>
    %89 = arith.mulf %85, %52 : vector<8x32xf32>
    %90 = arith.mulf %84, %88 : vector<8x32xf32>
    %91 = arith.addf %89, %90 : vector<8x32xf32>
    %92 = math.tanh %91 : vector<8x32xf32>
    %93 = arith.mulf %86, %92 : vector<8x32xf32>
    %94 = vector.extract_strided_slice %5 {offsets = [16, 0], sizes = [8, 128], strides = [1, 1]} : vector<64x128xf32> to vector<8x128xf32>
    %cst_27 = arith.constant dense<0.000000e+00> : vector<8x128xf32>
    %95 = tpu.matmul %73, %6, %cst_27 {dimension_numbers = #tpu.dot_dimension_numbers<[1], [0], [0], [1], [0, 0, 1, 1], [], []>} : vector<8x32xf32>, vector<32x128xf32>, vector<8x128xf32> -> vector<8x128xf32>
    %96 = arith.addf %94, %95 : vector<8x128xf32>
    %97 = vector.extract_strided_slice %96 {offsets = [0, 0], sizes = [8, 96], strides = [1, 1]} : vector<8x128xf32> to vector<8x96xf32>
    %98 = arith.negf %97 : vector<8x96xf32>
    %99 = math.exp %98 : vector<8x96xf32>
    %cst_28 = arith.constant 1.000000e+00 : f32
    %100 = vector.broadcast %cst_28 : f32 to vector<8x96xf32>
    %101 = arith.addf %100, %99 : vector<8x96xf32>
    %102 = arith.divf %100, %101 : vector<8x96xf32>
    %103 = vector.extract_strided_slice %102 {offsets = [0, 0], sizes = [8, 32], strides = [1, 1]} : vector<8x96xf32> to vector<8x32xf32>
    %104 = vector.extract_strided_slice %102 {offsets = [0, 32], sizes = [8, 32], strides = [1, 1]} : vector<8x96xf32> to vector<8x32xf32>
    %105 = vector.extract_strided_slice %102 {offsets = [0, 64], sizes = [8, 32], strides = [1, 1]} : vector<8x96xf32> to vector<8x32xf32>
    %106 = vector.extract_strided_slice %96 {offsets = [0, 96], sizes = [8, 32], strides = [1, 1]} : vector<8x128xf32> to vector<8x32xf32>
    %107 = math.tanh %106 : vector<8x32xf32>
    %108 = arith.mulf %104, %71 : vector<8x32xf32>
    %109 = arith.mulf %103, %107 : vector<8x32xf32>
    %110 = arith.addf %108, %109 : vector<8x32xf32>
    %111 = math.tanh %110 : vector<8x32xf32>
    %112 = arith.mulf %105, %111 : vector<8x32xf32>
    %cst_29 = arith.constant dense<0.000000e+00> : vector<8x128xf32>
    %113 = tpu.matmul %112, %8, %cst_29 {dimension_numbers = #tpu.dot_dimension_numbers<[1], [0], [0], [1], [0, 0, 1, 1], [], []>} : vector<8x32xf32>, vector<32x128xf32>, vector<8x128xf32> -> vector<8x128xf32>
    %cst_30 = arith.constant dense<0.000000e+00> : vector<8x128xf32>
    %114 = tpu.matmul %93, %7, %cst_30 {dimension_numbers = #tpu.dot_dimension_numbers<[1], [0], [0], [1], [0, 0, 1, 1], [], []>} : vector<8x32xf32>, vector<32x128xf32>, vector<8x128xf32> -> vector<8x128xf32>
    %115 = arith.addf %113, %114 : vector<8x128xf32>
    %116 = arith.addf %115, %11 : vector<8x128xf32>
    %117 = vector.extract_strided_slice %116 {offsets = [0, 0], sizes = [8, 96], strides = [1, 1]} : vector<8x128xf32> to vector<8x96xf32>
    %118 = arith.negf %117 : vector<8x96xf32>
    %119 = math.exp %118 : vector<8x96xf32>
    %cst_31 = arith.constant 1.000000e+00 : f32
    %120 = vector.broadcast %cst_31 : f32 to vector<8x96xf32>
    %121 = arith.addf %120, %119 : vector<8x96xf32>
    %122 = arith.divf %120, %121 : vector<8x96xf32>
    %123 = vector.extract_strided_slice %122 {offsets = [0, 0], sizes = [8, 32], strides = [1, 1]} : vector<8x96xf32> to vector<8x32xf32>
    %124 = vector.extract_strided_slice %122 {offsets = [0, 32], sizes = [8, 32], strides = [1, 1]} : vector<8x96xf32> to vector<8x32xf32>
    %125 = vector.extract_strided_slice %122 {offsets = [0, 64], sizes = [8, 32], strides = [1, 1]} : vector<8x96xf32> to vector<8x32xf32>
    %126 = vector.extract_strided_slice %116 {offsets = [0, 96], sizes = [8, 32], strides = [1, 1]} : vector<8x128xf32> to vector<8x32xf32>
    %127 = math.tanh %126 : vector<8x32xf32>
    %128 = arith.mulf %124, %91 : vector<8x32xf32>
    %129 = arith.mulf %123, %127 : vector<8x32xf32>
    %130 = arith.addf %128, %129 : vector<8x32xf32>
    %131 = math.tanh %130 : vector<8x32xf32>
    %132 = arith.mulf %125, %131 : vector<8x32xf32>
    %133 = vector.extract_strided_slice %5 {offsets = [24, 0], sizes = [8, 128], strides = [1, 1]} : vector<64x128xf32> to vector<8x128xf32>
    %cst_32 = arith.constant dense<0.000000e+00> : vector<8x128xf32>
    %134 = tpu.matmul %112, %6, %cst_32 {dimension_numbers = #tpu.dot_dimension_numbers<[1], [0], [0], [1], [0, 0, 1, 1], [], []>} : vector<8x32xf32>, vector<32x128xf32>, vector<8x128xf32> -> vector<8x128xf32>
    %135 = arith.addf %133, %134 : vector<8x128xf32>
    %136 = vector.extract_strided_slice %135 {offsets = [0, 0], sizes = [8, 96], strides = [1, 1]} : vector<8x128xf32> to vector<8x96xf32>
    %137 = arith.negf %136 : vector<8x96xf32>
    %138 = math.exp %137 : vector<8x96xf32>
    %cst_33 = arith.constant 1.000000e+00 : f32
    %139 = vector.broadcast %cst_33 : f32 to vector<8x96xf32>
    %140 = arith.addf %139, %138 : vector<8x96xf32>
    %141 = arith.divf %139, %140 : vector<8x96xf32>
    %142 = vector.extract_strided_slice %141 {offsets = [0, 0], sizes = [8, 32], strides = [1, 1]} : vector<8x96xf32> to vector<8x32xf32>
    %143 = vector.extract_strided_slice %141 {offsets = [0, 32], sizes = [8, 32], strides = [1, 1]} : vector<8x96xf32> to vector<8x32xf32>
    %144 = vector.extract_strided_slice %141 {offsets = [0, 64], sizes = [8, 32], strides = [1, 1]} : vector<8x96xf32> to vector<8x32xf32>
    %145 = vector.extract_strided_slice %135 {offsets = [0, 96], sizes = [8, 32], strides = [1, 1]} : vector<8x128xf32> to vector<8x32xf32>
    %146 = math.tanh %145 : vector<8x32xf32>
    %147 = arith.mulf %143, %110 : vector<8x32xf32>
    %148 = arith.mulf %142, %146 : vector<8x32xf32>
    %149 = arith.addf %147, %148 : vector<8x32xf32>
    %150 = math.tanh %149 : vector<8x32xf32>
    %151 = arith.mulf %144, %150 : vector<8x32xf32>
    %cst_34 = arith.constant dense<0.000000e+00> : vector<8x128xf32>
    %152 = tpu.matmul %151, %8, %cst_34 {dimension_numbers = #tpu.dot_dimension_numbers<[1], [0], [0], [1], [0, 0, 1, 1], [], []>} : vector<8x32xf32>, vector<32x128xf32>, vector<8x128xf32> -> vector<8x128xf32>
    %cst_35 = arith.constant dense<0.000000e+00> : vector<8x128xf32>
    %153 = tpu.matmul %132, %7, %cst_35 {dimension_numbers = #tpu.dot_dimension_numbers<[1], [0], [0], [1], [0, 0, 1, 1], [], []>} : vector<8x32xf32>, vector<32x128xf32>, vector<8x128xf32> -> vector<8x128xf32>
    %154 = arith.addf %152, %153 : vector<8x128xf32>
    %155 = arith.addf %154, %11 : vector<8x128xf32>
    %156 = vector.extract_strided_slice %155 {offsets = [0, 0], sizes = [8, 96], strides = [1, 1]} : vector<8x128xf32> to vector<8x96xf32>
    %157 = arith.negf %156 : vector<8x96xf32>
    %158 = math.exp %157 : vector<8x96xf32>
    %cst_36 = arith.constant 1.000000e+00 : f32
    %159 = vector.broadcast %cst_36 : f32 to vector<8x96xf32>
    %160 = arith.addf %159, %158 : vector<8x96xf32>
    %161 = arith.divf %159, %160 : vector<8x96xf32>
    %162 = vector.extract_strided_slice %161 {offsets = [0, 0], sizes = [8, 32], strides = [1, 1]} : vector<8x96xf32> to vector<8x32xf32>
    %163 = vector.extract_strided_slice %161 {offsets = [0, 32], sizes = [8, 32], strides = [1, 1]} : vector<8x96xf32> to vector<8x32xf32>
    %164 = vector.extract_strided_slice %161 {offsets = [0, 64], sizes = [8, 32], strides = [1, 1]} : vector<8x96xf32> to vector<8x32xf32>
    %165 = vector.extract_strided_slice %155 {offsets = [0, 96], sizes = [8, 32], strides = [1, 1]} : vector<8x128xf32> to vector<8x32xf32>
    %166 = math.tanh %165 : vector<8x32xf32>
    %167 = arith.mulf %163, %130 : vector<8x32xf32>
    %168 = arith.mulf %162, %166 : vector<8x32xf32>
    %169 = arith.addf %167, %168 : vector<8x32xf32>
    %170 = math.tanh %169 : vector<8x32xf32>
    %171 = arith.mulf %164, %170 : vector<8x32xf32>
    %172 = vector.extract_strided_slice %5 {offsets = [32, 0], sizes = [8, 128], strides = [1, 1]} : vector<64x128xf32> to vector<8x128xf32>
    %cst_37 = arith.constant dense<0.000000e+00> : vector<8x128xf32>
    %173 = tpu.matmul %151, %6, %cst_37 {dimension_numbers = #tpu.dot_dimension_numbers<[1], [0], [0], [1], [0, 0, 1, 1], [], []>} : vector<8x32xf32>, vector<32x128xf32>, vector<8x128xf32> -> vector<8x128xf32>
    %174 = arith.addf %172, %173 : vector<8x128xf32>
    %175 = vector.extract_strided_slice %174 {offsets = [0, 0], sizes = [8, 96], strides = [1, 1]} : vector<8x128xf32> to vector<8x96xf32>
    %176 = arith.negf %175 : vector<8x96xf32>
    %177 = math.exp %176 : vector<8x96xf32>
    %cst_38 = arith.constant 1.000000e+00 : f32
    %178 = vector.broadcast %cst_38 : f32 to vector<8x96xf32>
    %179 = arith.addf %178, %177 : vector<8x96xf32>
    %180 = arith.divf %178, %179 : vector<8x96xf32>
    %181 = vector.extract_strided_slice %180 {offsets = [0, 0], sizes = [8, 32], strides = [1, 1]} : vector<8x96xf32> to vector<8x32xf32>
    %182 = vector.extract_strided_slice %180 {offsets = [0, 32], sizes = [8, 32], strides = [1, 1]} : vector<8x96xf32> to vector<8x32xf32>
    %183 = vector.extract_strided_slice %180 {offsets = [0, 64], sizes = [8, 32], strides = [1, 1]} : vector<8x96xf32> to vector<8x32xf32>
    %184 = vector.extract_strided_slice %174 {offsets = [0, 96], sizes = [8, 32], strides = [1, 1]} : vector<8x128xf32> to vector<8x32xf32>
    %185 = math.tanh %184 : vector<8x32xf32>
    %186 = arith.mulf %182, %149 : vector<8x32xf32>
    %187 = arith.mulf %181, %185 : vector<8x32xf32>
    %188 = arith.addf %186, %187 : vector<8x32xf32>
    %189 = math.tanh %188 : vector<8x32xf32>
    %190 = arith.mulf %183, %189 : vector<8x32xf32>
    %cst_39 = arith.constant dense<0.000000e+00> : vector<8x128xf32>
    %191 = tpu.matmul %190, %8, %cst_39 {dimension_numbers = #tpu.dot_dimension_numbers<[1], [0], [0], [1], [0, 0, 1, 1], [], []>} : vector<8x32xf32>, vector<32x128xf32>, vector<8x128xf32> -> vector<8x128xf32>
    %cst_40 = arith.constant dense<0.000000e+00> : vector<8x128xf32>
    %192 = tpu.matmul %171, %7, %cst_40 {dimension_numbers = #tpu.dot_dimension_numbers<[1], [0], [0], [1], [0, 0, 1, 1], [], []>} : vector<8x32xf32>, vector<32x128xf32>, vector<8x128xf32> -> vector<8x128xf32>
    %193 = arith.addf %191, %192 : vector<8x128xf32>
    %194 = arith.addf %193, %11 : vector<8x128xf32>
    %195 = vector.extract_strided_slice %194 {offsets = [0, 0], sizes = [8, 96], strides = [1, 1]} : vector<8x128xf32> to vector<8x96xf32>
    %196 = arith.negf %195 : vector<8x96xf32>
    %197 = math.exp %196 : vector<8x96xf32>
    %cst_41 = arith.constant 1.000000e+00 : f32
    %198 = vector.broadcast %cst_41 : f32 to vector<8x96xf32>
    %199 = arith.addf %198, %197 : vector<8x96xf32>
    %200 = arith.divf %198, %199 : vector<8x96xf32>
    %201 = vector.extract_strided_slice %200 {offsets = [0, 0], sizes = [8, 32], strides = [1, 1]} : vector<8x96xf32> to vector<8x32xf32>
    %202 = vector.extract_strided_slice %200 {offsets = [0, 32], sizes = [8, 32], strides = [1, 1]} : vector<8x96xf32> to vector<8x32xf32>
    %203 = vector.extract_strided_slice %200 {offsets = [0, 64], sizes = [8, 32], strides = [1, 1]} : vector<8x96xf32> to vector<8x32xf32>
    %204 = vector.extract_strided_slice %194 {offsets = [0, 96], sizes = [8, 32], strides = [1, 1]} : vector<8x128xf32> to vector<8x32xf32>
    %205 = math.tanh %204 : vector<8x32xf32>
    %206 = arith.mulf %202, %169 : vector<8x32xf32>
    %207 = arith.mulf %201, %205 : vector<8x32xf32>
    %208 = arith.addf %206, %207 : vector<8x32xf32>
    %209 = math.tanh %208 : vector<8x32xf32>
    %210 = arith.mulf %203, %209 : vector<8x32xf32>
    %211 = vector.extract_strided_slice %5 {offsets = [40, 0], sizes = [8, 128], strides = [1, 1]} : vector<64x128xf32> to vector<8x128xf32>
    %cst_42 = arith.constant dense<0.000000e+00> : vector<8x128xf32>
    %212 = tpu.matmul %190, %6, %cst_42 {dimension_numbers = #tpu.dot_dimension_numbers<[1], [0], [0], [1], [0, 0, 1, 1], [], []>} : vector<8x32xf32>, vector<32x128xf32>, vector<8x128xf32> -> vector<8x128xf32>
    %213 = arith.addf %211, %212 : vector<8x128xf32>
    %214 = vector.extract_strided_slice %213 {offsets = [0, 0], sizes = [8, 96], strides = [1, 1]} : vector<8x128xf32> to vector<8x96xf32>
    %215 = arith.negf %214 : vector<8x96xf32>
    %216 = math.exp %215 : vector<8x96xf32>
    %cst_43 = arith.constant 1.000000e+00 : f32
    %217 = vector.broadcast %cst_43 : f32 to vector<8x96xf32>
    %218 = arith.addf %217, %216 : vector<8x96xf32>
    %219 = arith.divf %217, %218 : vector<8x96xf32>
    %220 = vector.extract_strided_slice %219 {offsets = [0, 0], sizes = [8, 32], strides = [1, 1]} : vector<8x96xf32> to vector<8x32xf32>
    %221 = vector.extract_strided_slice %219 {offsets = [0, 32], sizes = [8, 32], strides = [1, 1]} : vector<8x96xf32> to vector<8x32xf32>
    %222 = vector.extract_strided_slice %219 {offsets = [0, 64], sizes = [8, 32], strides = [1, 1]} : vector<8x96xf32> to vector<8x32xf32>
    %223 = vector.extract_strided_slice %213 {offsets = [0, 96], sizes = [8, 32], strides = [1, 1]} : vector<8x128xf32> to vector<8x32xf32>
    %224 = math.tanh %223 : vector<8x32xf32>
    %225 = arith.mulf %221, %188 : vector<8x32xf32>
    %226 = arith.mulf %220, %224 : vector<8x32xf32>
    %227 = arith.addf %225, %226 : vector<8x32xf32>
    %228 = math.tanh %227 : vector<8x32xf32>
    %229 = arith.mulf %222, %228 : vector<8x32xf32>
    %cst_44 = arith.constant dense<0.000000e+00> : vector<8x128xf32>
    %230 = tpu.matmul %229, %8, %cst_44 {dimension_numbers = #tpu.dot_dimension_numbers<[1], [0], [0], [1], [0, 0, 1, 1], [], []>} : vector<8x32xf32>, vector<32x128xf32>, vector<8x128xf32> -> vector<8x128xf32>
    %cst_45 = arith.constant dense<0.000000e+00> : vector<8x128xf32>
    %231 = tpu.matmul %210, %7, %cst_45 {dimension_numbers = #tpu.dot_dimension_numbers<[1], [0], [0], [1], [0, 0, 1, 1], [], []>} : vector<8x32xf32>, vector<32x128xf32>, vector<8x128xf32> -> vector<8x128xf32>
    %232 = arith.addf %230, %231 : vector<8x128xf32>
    %233 = arith.addf %232, %11 : vector<8x128xf32>
    %234 = vector.extract_strided_slice %233 {offsets = [0, 0], sizes = [8, 96], strides = [1, 1]} : vector<8x128xf32> to vector<8x96xf32>
    %235 = arith.negf %234 : vector<8x96xf32>
    %236 = math.exp %235 : vector<8x96xf32>
    %cst_46 = arith.constant 1.000000e+00 : f32
    %237 = vector.broadcast %cst_46 : f32 to vector<8x96xf32>
    %238 = arith.addf %237, %236 : vector<8x96xf32>
    %239 = arith.divf %237, %238 : vector<8x96xf32>
    %240 = vector.extract_strided_slice %239 {offsets = [0, 0], sizes = [8, 32], strides = [1, 1]} : vector<8x96xf32> to vector<8x32xf32>
    %241 = vector.extract_strided_slice %239 {offsets = [0, 32], sizes = [8, 32], strides = [1, 1]} : vector<8x96xf32> to vector<8x32xf32>
    %242 = vector.extract_strided_slice %239 {offsets = [0, 64], sizes = [8, 32], strides = [1, 1]} : vector<8x96xf32> to vector<8x32xf32>
    %243 = vector.extract_strided_slice %233 {offsets = [0, 96], sizes = [8, 32], strides = [1, 1]} : vector<8x128xf32> to vector<8x32xf32>
    %244 = math.tanh %243 : vector<8x32xf32>
    %245 = arith.mulf %241, %208 : vector<8x32xf32>
    %246 = arith.mulf %240, %244 : vector<8x32xf32>
    %247 = arith.addf %245, %246 : vector<8x32xf32>
    %248 = math.tanh %247 : vector<8x32xf32>
    %249 = arith.mulf %242, %248 : vector<8x32xf32>
    %250 = vector.extract_strided_slice %5 {offsets = [48, 0], sizes = [8, 128], strides = [1, 1]} : vector<64x128xf32> to vector<8x128xf32>
    %cst_47 = arith.constant dense<0.000000e+00> : vector<8x128xf32>
    %251 = tpu.matmul %229, %6, %cst_47 {dimension_numbers = #tpu.dot_dimension_numbers<[1], [0], [0], [1], [0, 0, 1, 1], [], []>} : vector<8x32xf32>, vector<32x128xf32>, vector<8x128xf32> -> vector<8x128xf32>
    %252 = arith.addf %250, %251 : vector<8x128xf32>
    %253 = vector.extract_strided_slice %252 {offsets = [0, 0], sizes = [8, 96], strides = [1, 1]} : vector<8x128xf32> to vector<8x96xf32>
    %254 = arith.negf %253 : vector<8x96xf32>
    %255 = math.exp %254 : vector<8x96xf32>
    %cst_48 = arith.constant 1.000000e+00 : f32
    %256 = vector.broadcast %cst_48 : f32 to vector<8x96xf32>
    %257 = arith.addf %256, %255 : vector<8x96xf32>
    %258 = arith.divf %256, %257 : vector<8x96xf32>
    %259 = vector.extract_strided_slice %258 {offsets = [0, 0], sizes = [8, 32], strides = [1, 1]} : vector<8x96xf32> to vector<8x32xf32>
    %260 = vector.extract_strided_slice %258 {offsets = [0, 32], sizes = [8, 32], strides = [1, 1]} : vector<8x96xf32> to vector<8x32xf32>
    %261 = vector.extract_strided_slice %258 {offsets = [0, 64], sizes = [8, 32], strides = [1, 1]} : vector<8x96xf32> to vector<8x32xf32>
    %262 = vector.extract_strided_slice %252 {offsets = [0, 96], sizes = [8, 32], strides = [1, 1]} : vector<8x128xf32> to vector<8x32xf32>
    %263 = math.tanh %262 : vector<8x32xf32>
    %264 = arith.mulf %260, %227 : vector<8x32xf32>
    %265 = arith.mulf %259, %263 : vector<8x32xf32>
    %266 = arith.addf %264, %265 : vector<8x32xf32>
    %267 = math.tanh %266 : vector<8x32xf32>
    %268 = arith.mulf %261, %267 : vector<8x32xf32>
    %cst_49 = arith.constant dense<0.000000e+00> : vector<8x128xf32>
    %269 = tpu.matmul %268, %8, %cst_49 {dimension_numbers = #tpu.dot_dimension_numbers<[1], [0], [0], [1], [0, 0, 1, 1], [], []>} : vector<8x32xf32>, vector<32x128xf32>, vector<8x128xf32> -> vector<8x128xf32>
    %cst_50 = arith.constant dense<0.000000e+00> : vector<8x128xf32>
    %270 = tpu.matmul %249, %7, %cst_50 {dimension_numbers = #tpu.dot_dimension_numbers<[1], [0], [0], [1], [0, 0, 1, 1], [], []>} : vector<8x32xf32>, vector<32x128xf32>, vector<8x128xf32> -> vector<8x128xf32>
    %271 = arith.addf %269, %270 : vector<8x128xf32>
    %272 = arith.addf %271, %11 : vector<8x128xf32>
    %273 = vector.extract_strided_slice %272 {offsets = [0, 0], sizes = [8, 96], strides = [1, 1]} : vector<8x128xf32> to vector<8x96xf32>
    %274 = arith.negf %273 : vector<8x96xf32>
    %275 = math.exp %274 : vector<8x96xf32>
    %cst_51 = arith.constant 1.000000e+00 : f32
    %276 = vector.broadcast %cst_51 : f32 to vector<8x96xf32>
    %277 = arith.addf %276, %275 : vector<8x96xf32>
    %278 = arith.divf %276, %277 : vector<8x96xf32>
    %279 = vector.extract_strided_slice %278 {offsets = [0, 0], sizes = [8, 32], strides = [1, 1]} : vector<8x96xf32> to vector<8x32xf32>
    %280 = vector.extract_strided_slice %278 {offsets = [0, 32], sizes = [8, 32], strides = [1, 1]} : vector<8x96xf32> to vector<8x32xf32>
    %281 = vector.extract_strided_slice %278 {offsets = [0, 64], sizes = [8, 32], strides = [1, 1]} : vector<8x96xf32> to vector<8x32xf32>
    %282 = vector.extract_strided_slice %272 {offsets = [0, 96], sizes = [8, 32], strides = [1, 1]} : vector<8x128xf32> to vector<8x32xf32>
    %283 = math.tanh %282 : vector<8x32xf32>
    %284 = arith.mulf %280, %247 : vector<8x32xf32>
    %285 = arith.mulf %279, %283 : vector<8x32xf32>
    %286 = arith.addf %284, %285 : vector<8x32xf32>
    %287 = math.tanh %286 : vector<8x32xf32>
    %288 = arith.mulf %281, %287 : vector<8x32xf32>
    %289 = vector.extract_strided_slice %5 {offsets = [56, 0], sizes = [8, 128], strides = [1, 1]} : vector<64x128xf32> to vector<8x128xf32>
    %cst_52 = arith.constant dense<0.000000e+00> : vector<8x128xf32>
    %290 = tpu.matmul %268, %6, %cst_52 {dimension_numbers = #tpu.dot_dimension_numbers<[1], [0], [0], [1], [0, 0, 1, 1], [], []>} : vector<8x32xf32>, vector<32x128xf32>, vector<8x128xf32> -> vector<8x128xf32>
    %291 = arith.addf %289, %290 : vector<8x128xf32>
    %292 = vector.extract_strided_slice %291 {offsets = [0, 0], sizes = [8, 96], strides = [1, 1]} : vector<8x128xf32> to vector<8x96xf32>
    %293 = arith.negf %292 : vector<8x96xf32>
    %294 = math.exp %293 : vector<8x96xf32>
    %cst_53 = arith.constant 1.000000e+00 : f32
    %295 = vector.broadcast %cst_53 : f32 to vector<8x96xf32>
    %296 = arith.addf %295, %294 : vector<8x96xf32>
    %297 = arith.divf %295, %296 : vector<8x96xf32>
    %298 = vector.extract_strided_slice %297 {offsets = [0, 0], sizes = [8, 32], strides = [1, 1]} : vector<8x96xf32> to vector<8x32xf32>
    %299 = vector.extract_strided_slice %297 {offsets = [0, 32], sizes = [8, 32], strides = [1, 1]} : vector<8x96xf32> to vector<8x32xf32>
    %300 = vector.extract_strided_slice %297 {offsets = [0, 64], sizes = [8, 32], strides = [1, 1]} : vector<8x96xf32> to vector<8x32xf32>
    %301 = vector.extract_strided_slice %291 {offsets = [0, 96], sizes = [8, 32], strides = [1, 1]} : vector<8x128xf32> to vector<8x32xf32>
    %302 = math.tanh %301 : vector<8x32xf32>
    %303 = arith.mulf %299, %266 : vector<8x32xf32>
    %304 = arith.mulf %298, %302 : vector<8x32xf32>
    %305 = arith.addf %303, %304 : vector<8x32xf32>
    %306 = math.tanh %305 : vector<8x32xf32>
    %307 = arith.mulf %300, %306 : vector<8x32xf32>
    %cst_54 = arith.constant dense<0.000000e+00> : vector<8x128xf32>
    %308 = tpu.matmul %307, %8, %cst_54 {dimension_numbers = #tpu.dot_dimension_numbers<[1], [0], [0], [1], [0, 0, 1, 1], [], []>} : vector<8x32xf32>, vector<32x128xf32>, vector<8x128xf32> -> vector<8x128xf32>
    %cst_55 = arith.constant dense<0.000000e+00> : vector<8x128xf32>
    %309 = tpu.matmul %288, %7, %cst_55 {dimension_numbers = #tpu.dot_dimension_numbers<[1], [0], [0], [1], [0, 0, 1, 1], [], []>} : vector<8x32xf32>, vector<32x128xf32>, vector<8x128xf32> -> vector<8x128xf32>
    %310 = arith.addf %308, %309 : vector<8x128xf32>
    %311 = arith.addf %310, %11 : vector<8x128xf32>
    %312 = vector.extract_strided_slice %311 {offsets = [0, 0], sizes = [8, 96], strides = [1, 1]} : vector<8x128xf32> to vector<8x96xf32>
    %313 = arith.negf %312 : vector<8x96xf32>
    %314 = math.exp %313 : vector<8x96xf32>
    %cst_56 = arith.constant 1.000000e+00 : f32
    %315 = vector.broadcast %cst_56 : f32 to vector<8x96xf32>
    %316 = arith.addf %315, %314 : vector<8x96xf32>
    %317 = arith.divf %315, %316 : vector<8x96xf32>
    %318 = vector.extract_strided_slice %317 {offsets = [0, 0], sizes = [8, 32], strides = [1, 1]} : vector<8x96xf32> to vector<8x32xf32>
    %319 = vector.extract_strided_slice %317 {offsets = [0, 32], sizes = [8, 32], strides = [1, 1]} : vector<8x96xf32> to vector<8x32xf32>
    %320 = vector.extract_strided_slice %317 {offsets = [0, 64], sizes = [8, 32], strides = [1, 1]} : vector<8x96xf32> to vector<8x32xf32>
    %321 = vector.extract_strided_slice %311 {offsets = [0, 96], sizes = [8, 32], strides = [1, 1]} : vector<8x128xf32> to vector<8x32xf32>
    %322 = math.tanh %321 : vector<8x32xf32>
    %323 = arith.mulf %319, %286 : vector<8x32xf32>
    %324 = arith.mulf %318, %322 : vector<8x32xf32>
    %325 = arith.addf %323, %324 : vector<8x32xf32>
    %326 = math.tanh %325 : vector<8x32xf32>
    %327 = arith.mulf %320, %326 : vector<8x32xf32>
    %c0_57 = arith.constant 0 : index
    %c0_58 = arith.constant 0 : index
    %328 = vector.load %arg7[%c0_57, %c0_58] : memref<32x4xf32, #tpu.memory_space<vmem>>, vector<32x4xf32>
    %cst_59 = arith.constant dense<0.000000e+00> : vector<8x4xf32>
    %329 = tpu.matmul %327, %328, %cst_59 {dimension_numbers = #tpu.dot_dimension_numbers<[1], [0], [0], [1], [0, 0, 1, 1], [], []>} : vector<8x32xf32>, vector<32x4xf32>, vector<8x4xf32> -> vector<8x4xf32>
    %c0_60 = arith.constant 0 : index
    %c0_61 = arith.constant 0 : index
    %330 = vector.load %arg8[%c0_60, %c0_61] : memref<1x4xf32, #tpu.memory_space<vmem>>, vector<1x4xf32>
    %331 = vector.broadcast %330 : vector<1x4xf32> to vector<8x4xf32>
    %332 = arith.addf %329, %331 : vector<8x4xf32>
    %c0_62 = arith.constant 0 : index
    %c0_63 = arith.constant 0 : index
    %333 = vector.load %arg9[%c0_62, %c0_63] : memref<8x4xf32, #tpu.memory_space<vmem>>, vector<8x4xf32>
    tpu.vector_store %arg9[%c0_62, %c0_63], %332 {strides = array<i32>} : memref<8x4xf32, #tpu.memory_space<vmem>>, vector<8x4xf32>,
    return
  }
}

</mosaic_0001>

<llo_original>
// kernel: lstm_model_forward.1
$region0: #{lstm_model_forward.1}
  #allocation0 [shape = 'u32[]', space=smem, size = 0x4, offset = 0x4, fixed_abs, tag = 'smem constant byte address 0x4 - core index']
  #allocation1 [shape = 'u32[72,128]{1,0:T(1,128)}', space=vmem, size = 0x9000, scoped, tag = 'internal scratch']
  %s0 = inlined_call_operand.vmem [shape: f32[64,8], index: 0, kind: input, shape index: {}]
  %s1 = inlined_call_operand.vmem [shape: f32[8,128], index: 1, kind: input, shape index: {}]
  %s2 = inlined_call_operand.vmem [shape: f32[32,128], index: 2, kind: input, shape index: {}]
  %s3 = inlined_call_operand.vmem [shape: f32[1,128], index: 3, kind: input, shape index: {}]
  %s4 = inlined_call_operand.vmem [shape: f32[32,128], index: 4, kind: input, shape index: {}]
  %s5 = inlined_call_operand.vmem [shape: f32[32,128], index: 5, kind: input, shape index: {}]
  %s6 = inlined_call_operand.vmem [shape: f32[1,128], index: 6, kind: input, shape index: {}]
  %s7 = inlined_call_operand.vmem [shape: f32[32,4], index: 7, kind: input, shape index: {}]
  %s8 = inlined_call_operand.vmem [shape: f32[1,4], index: 8, kind: input, shape index: {}]
  %s9 = inlined_call_operand.vmem [shape: f32[8,4], index: 9, kind: output, shape index: {}]
  %s10 = sld [smem:[#allocation0]]
  $region46: #{lstm_model_forward.1} parent=0
    _
  %s12 = ssub.s32 1, %s10
  %s13 = scalar_select 0, %s12, %s10
  // Predicated region
  $region2: #{lstm_model_forward.1} parent=0 // pred_check
    _
  $region3: #{lstm_model_forward.1} parent=0 // pred_check_branch
    %15 = sbr.rel (0) target = $region5
  $region4: #{lstm_model_forward.1} parent=0 // pred_region
    _
  $region5: #{lstm_model_forward.1} parent=0 // pred_fallthru
    _
  // Predicated region
  $region6: #{lstm_model_forward.1} parent=0 // pred_check
    _
  $region7: #{lstm_model_forward.1} parent=0 // pred_check_branch
    %17 = sbr.rel (0) target = $region9
  $region8: #{lstm_model_forward.1} parent=0 // pred_region
    _
  $region9: #{lstm_model_forward.1} parent=0 // pred_fallthru
    _
  // Predicated region
  $region10: #{lstm_model_forward.1} parent=0 // pred_check
    _
  $region11: #{lstm_model_forward.1} parent=0 // pred_check_branch
    %19 = sbr.rel (0) target = $region13
  $region12: #{lstm_model_forward.1} parent=0 // pred_region
    _
  $region13: #{lstm_model_forward.1} parent=0 // pred_fallthru
    _
  // Predicated region
  $region14: #{lstm_model_forward.1} parent=0 // pred_check
    _
  $region15: #{lstm_model_forward.1} parent=0 // pred_check_branch
    %21 = sbr.rel (0) target = $region17
  $region16: #{lstm_model_forward.1} parent=0 // pred_region
    _
  $region17: #{lstm_model_forward.1} parent=0 // pred_fallthru
    _
  // Predicated region
  $region18: #{lstm_model_forward.1} parent=0 // pred_check
    _
  $region19: #{lstm_model_forward.1} parent=0 // pred_check_branch
    %23 = sbr.rel (0) target = $region21
  $region20: #{lstm_model_forward.1} parent=0 // pred_region
    _
  $region21: #{lstm_model_forward.1} parent=0 // pred_fallthru
    _
  // Predicated region
  $region22: #{lstm_model_forward.1} parent=0 // pred_check
    _
  $region23: #{lstm_model_forward.1} parent=0 // pred_check_branch
    %25 = sbr.rel (0) target = $region25
  $region24: #{lstm_model_forward.1} parent=0 // pred_region
    _
  $region25: #{lstm_model_forward.1} parent=0 // pred_fallthru
    _
  // Predicated region
  $region26: #{lstm_model_forward.1} parent=0 // pred_check
    _
  $region27: #{lstm_model_forward.1} parent=0 // pred_check_branch
    %27 = sbr.rel (0) target = $region29
  $region28: #{lstm_model_forward.1} parent=0 // pred_region
    _
  $region29: #{lstm_model_forward.1} parent=0 // pred_fallthru
    _
  // Predicated region
  $region30: #{lstm_model_forward.1} parent=0 // pred_check
    _
  $region31: #{lstm_model_forward.1} parent=0 // pred_check_branch
    %29 = sbr.rel (0) target = $region33
  $region32: #{lstm_model_forward.1} parent=0 // pred_region
    _
  $region33: #{lstm_model_forward.1} parent=0 // pred_fallthru
    _
  // Predicated region
  $region34: #{lstm_model_forward.1} parent=0 // pred_check
    _
  $region35: #{lstm_model_forward.1} parent=0 // pred_check_branch
    %31 = sbr.rel (0) target = $region37
  $region36: #{lstm_model_forward.1} parent=0 // pred_region
    _
  $region37: #{lstm_model_forward.1} parent=0 // pred_fallthru
    _
  %v32 = vld [vmem:[%s0] sm:$0xff]
  %v33 = vld [vmem:[%s0 + $0x8] sm:$0xff]
  %v34 = vld [vmem:[%s0 + $0x10] sm:$0xff]
  %v35 = vld [vmem:[%s0 + $0x18] sm:$0xff]
  %v36 = vld [vmem:[%s0 + $0x20] sm:$0xff]
  %v37 = vld [vmem:[%s0 + $0x28] sm:$0xff]
  %v38 = vld [vmem:[%s0 + $0x30] sm:$0xff]
  %v39 = vld [vmem:[%s0 + $0x38] sm:$0xff]
  %v40 = vld [vmem:[%s1] sm:$0xff]
  %v41 = vld [vmem:[%s3] sm:$0x1]
  %v43 = vperm.slane %v41, 0
  %vm45 = vcmask 64512
  %v47 = vsel %vm45, %v32, 0
  %v50 = vsel %vm45, %v33, 0
  %v53 = vsel %vm45, %v34, 0
  %v56 = vsel %vm45, %v35, 0
  %v59 = vsel %vm45, %v36, 0
  %v62 = vsel %vm45, %v37, 0
  %v65 = vsel %vm45, %v38, 0
  %v68 = vsel %vm45, %v39, 0
  %70 = vmatpush.msra.mxu0 0.0
  %71 = vmatpush.msra.mxu0 0.0
  %72 = vmatpush.msra.mxu0 0.0
  %73 = vmatpush.msra.mxu0 0.0
  %74 = vmatpush.msra.mxu0 0.0
  %75 = vmatpush.msra.mxu0 0.0
  %76 = vmatpush.msra.mxu0 0.0
  %77 = vmatpush.msra.mxu0 0.0
  %78 = vmatpush.msra.mxu0 0.0
  %79 = vmatpush.msra.mxu0 0.0
  %80 = vmatpush.msra.mxu0 0.0
  %81 = vmatpush.msra.mxu0 0.0
  %82 = vmatpush.msra.mxu0 0.0
  %83 = vmatpush.msra.mxu0 0.0
  %84 = vmatpush.msra.mxu0 0.0
  %85 = vmatpush.msra.mxu0 %v40
  %86 = vmatmul.f32.gmra.mxu0 %v47
  %v87 = vpop.f32.mrf.mxu0
  %v88 = vadd.f32 %v43, %v87
  %89 = vmatmul.f32.gmra.mxu0 %v50
  %v90 = vpop.f32.mrf.mxu0
  %v91 = vadd.f32 %v43, %v90
  %92 = vmatmul.f32.gmra.mxu0 %v53
  %v93 = vpop.f32.mrf.mxu0
  %v94 = vadd.f32 %v43, %v93
  %95 = vmatmul.f32.gmra.mxu0 %v56
  %v96 = vpop.f32.mrf.mxu0
  %v97 = vadd.f32 %v43, %v96
  %98 = vmatmul.f32.gmra.mxu0 %v59
  %v99 = vpop.f32.mrf.mxu0
  %v100 = vadd.f32 %v43, %v99
  %101 = vmatmul.f32.gmra.mxu0 %v62
  %v102 = vpop.f32.mrf.mxu0
  %v103 = vadd.f32 %v43, %v102
  %104 = vmatmul.f32.gmra.mxu0 %v65
  %v105 = vpop.f32.mrf.mxu0
  %v106 = vadd.f32 %v43, %v105
  %107 = vmatmul.f32.gmra.mxu0 %v68
  %v108 = vpop.f32.mrf.mxu0
  %v109 = vadd.f32 %v43, %v108
  %110 = vdwg.mxu0
  %v111 = vld [vmem:[%s2] sm:$0xff]
  %v112 = vld [vmem:[%s2 + $0x8] sm:$0xff]
  %v113 = vld [vmem:[%s2 + $0x10] sm:$0xff]
  %v114 = vld [vmem:[%s2 + $0x18] sm:$0xff]
  %v115 = vld [vmem:[%s5] sm:$0xff]
  %v116 = vld [vmem:[%s5 + $0x8] sm:$0xff]
  %v117 = vld [vmem:[%s5 + $0x10] sm:$0xff]
  %v118 = vld [vmem:[%s5 + $0x18] sm:$0xff]
  %v119 = vld [vmem:[%s4] sm:$0xff]
  %v120 = vld [vmem:[%s4 + $0x8] sm:$0xff]
  %v121 = vld [vmem:[%s4 + $0x10] sm:$0xff]
  %v122 = vld [vmem:[%s4 + $0x18] sm:$0xff]
  %v123 = vld [vmem:[%s6] sm:$0x1]
  %v125 = vperm.slane %v123, 0
  %vm127 = vcmask 261120
  %v129 = vsel %vm127, 0.0, 0
  %131 = vmatpush.msra.mxu0 0.0
  %132 = vmatpush.msra.mxu0 0.0
  %133 = vmatpush.msra.mxu0 0.0
  %134 = vmatpush.msra.mxu0 0.0
  %135 = vmatpush.msra.mxu0 0.0
  %136 = vmatpush.msra.mxu0 0.0
  %137 = vmatpush.msra.mxu0 0.0
  %138 = vmatpush.msra.mxu0 0.0
  %139 = vmatpush.msra.mxu0 0.0
  %140 = vmatpush.msra.mxu0 0.0
  %141 = vmatpush.msra.mxu0 0.0
  %142 = vmatpush.msra.mxu0 0.0
  %143 = vmatpush.msra.mxu0 %v114
  %144 = vmatpush.msra.mxu0 %v113
  %145 = vmatpush.msra.mxu0 %v112
  %146 = vmatpush.msra.mxu0 %v111
  %147 = vmatmul.f32.gmra.mxu0 %v129
  %v148 = vpop.f32.mrf.mxu0
  %v149 = vadd.f32 0.0, %v148
  %150 = vdwg.mxu0
  %v151 = vadd.f32 %v88, %v149
  %v152 = vxor.u32 %v151, 2147483648
  %v153 = vmul.f32 %v152, 1.442695
  %v154 = vpow.pop %v153
  %v155 = vadd.f32 %v154, 1.0
  %v156 = vrcp.pop %v155
  %v157 = vmul.f32 %v155, %v156
  %v158 = vsub.f32 1.0, %v157
  %v159 = vmul.f32 %v156, %v158
  %v160 = vadd.f32 %v156, %v159
  %vm161 = vweird.f32 %v155
  %vm162 = vweird.f32 %v156
  %vm163 = vmor %vm161, %vm162
  %v164 = vsel %vm163, %v156, %v160
  %v165 = vand.u32 2147483647, %v155
  %vm166 = vcmp.eq.f32.partialorder %v165, 8.507059e+37
  %v167 = vand.u32 %v155, 2147483648
  %v168 = vor.u32 1.1754944e-38, %v167
  %v169 = vsel %vm166, %v168, %v164
  %v170 = vmul.f32 1.0, %v169
  %v171 = vtanh.pop %v151
  %v172 = vmul.f32 %v170, 0.0
  %174 = vrot.lane.b32.xlu0 %v171, 32
  %v175 = vpop.permute.xlu0 %174
  %v177 = vmul.f32 %v170, %v175
  %179 = vrot.lane.b32.xlu0 %v177, 32
  %v180 = vpop.permute.xlu0 %179
  %v182 = vadd.f32 %v172, %v180
  %v183 = vtanh.pop %v182
  %185 = vrot.lane.b32.xlu0 %v183, 32
  %v186 = vpop.permute.xlu0 %185
  %v188 = vmul.f32 %v170, %v186
  %189 = vmatpush.msra.mxu0 0.0
  %190 = vmatpush.msra.mxu0 0.0
  %191 = vmatpush.msra.mxu0 0.0
  %192 = vmatpush.msra.mxu0 0.0
  %193 = vmatpush.msra.mxu0 0.0
  %194 = vmatpush.msra.mxu0 0.0
  %195 = vmatpush.msra.mxu0 0.0
  %196 = vmatpush.msra.mxu0 0.0
  %197 = vmatpush.msra.mxu0 0.0
  %198 = vmatpush.msra.mxu0 0.0
  %199 = vmatpush.msra.mxu0 0.0
  %200 = vmatpush.msra.mxu0 0.0
  %201 = vmatpush.msra.mxu0 %v118
  %202 = vmatpush.msra.mxu0 %v117
  %203 = vmatpush.msra.mxu0 %v116
  %204 = vmatpush.msra.mxu0 %v115
  %205 = vmatmul.f32.gmra.mxu0 %v129
  %v206 = vpop.f32.mrf.mxu0
  %v207 = vadd.f32 0.0, %v206
  %208 = vdwg.mxu0
  %210 = vrot.lane.b32.xlu0 %v188, 64
  %v211 = vpop.permute.xlu0 %210
  %v212 = vsel %vm127, %v211, 0
  %214 = vmatpush.msra.mxu0 0.0
  %215 = vmatpush.msra.mxu0 0.0
  %216 = vmatpush.msra.mxu0 0.0
  %217 = vmatpush.msra.mxu0 0.0
  %218 = vmatpush.msra.mxu0 0.0
  %219 = vmatpush.msra.mxu0 0.0
  %220 = vmatpush.msra.mxu0 0.0
  %221 = vmatpush.msra.mxu0 0.0
  %222 = vmatpush.msra.mxu0 0.0
  %223 = vmatpush.msra.mxu0 0.0
  %224 = vmatpush.msra.mxu0 0.0
  %225 = vmatpush.msra.mxu0 0.0
  %226 = vmatpush.msra.mxu0 %v122
  %227 = vmatpush.msra.mxu0 %v121
  %228 = vmatpush.msra.mxu0 %v120
  %229 = vmatpush.msra.mxu0 %v119
  %230 = vmatmul.f32.gmra.mxu0 %v212
  %v231 = vpop.f32.mrf.mxu0
  %v232 = vadd.f32 %v207, %v231
  %233 = vdwg.mxu0
  %v234 = vadd.f32 %v232, %v125
  %v235 = vxor.u32 %v234, 2147483648
  %v236 = vmul.f32 %v235, 1.442695
  %v237 = vpow.pop %v236
  %v238 = vadd.f32 %v237, 1.0
  %v239 = vrcp.pop %v238
  %v240 = vmul.f32 %v238, %v239
  %v241 = vsub.f32 1.0, %v240
  %v242 = vmul.f32 %v239, %v241
  %v243 = vadd.f32 %v239, %v242
  %vm244 = vweird.f32 %v238
  %vm245 = vweird.f32 %v239
  %vm246 = vmor %vm244, %vm245
  %v247 = vsel %vm246, %v239, %v243
  %v248 = vand.u32 2147483647, %v238
  %vm249 = vcmp.eq.f32.partialorder %v248, 8.507059e+37
  %v250 = vand.u32 %v238, 2147483648
  %v251 = vor.u32 1.1754944e-38, %v250
  %v252 = vsel %vm249, %v251, %v247
  %v253 = vmul.f32 1.0, %v252
  %v254 = vtanh.pop %v234
  %v255 = vmul.f32 %v253, 0.0
  %257 = vrot.lane.b32.xlu0 %v254, 32
  %v258 = vpop.permute.xlu0 %257
  %v260 = vmul.f32 %v253, %v258
  %262 = vrot.lane.b32.xlu0 %v260, 32
  %v263 = vpop.permute.xlu0 %262
  %v265 = vadd.f32 %v255, %v263
  %v266 = vtanh.pop %v265
  %268 = vrot.lane.b32.xlu0 %v266, 32
  %v269 = vpop.permute.xlu0 %268
  %v271 = vmul.f32 %v253, %v269
  %272 = vmatpush.msra.mxu0 0.0
  %273 = vmatpush.msra.mxu0 0.0
  %274 = vmatpush.msra.mxu0 0.0
  %275 = vmatpush.msra.mxu0 0.0
  %276 = vmatpush.msra.mxu0 0.0
  %277 = vmatpush.msra.mxu0 0.0
  %278 = vmatpush.msra.mxu0 0.0
  %279 = vmatpush.msra.mxu0 0.0
  %280 = vmatpush.msra.mxu0 0.0
  %281 = vmatpush.msra.mxu0 0.0
  %282 = vmatpush.msra.mxu0 0.0
  %283 = vmatpush.msra.mxu0 0.0
  %284 = vmatpush.msra.mxu0 %v114
  %285 = vmatpush.msra.mxu0 %v113
  %286 = vmatpush.msra.mxu0 %v112
  %287 = vmatpush.msra.mxu0 %v111
  %288 = vmatmul.f32.gmra.mxu0 %v212
  %v289 = vpop.f32.mrf.mxu0
  %v290 = vadd.f32 0.0, %v289
  %291 = vdwg.mxu0
  %v292 = vadd.f32 %v91, %v290
  %v293 = vxor.u32 %v292, 2147483648
  %v294 = vmul.f32 %v293, 1.442695
  %v295 = vpow.pop %v294
  %v296 = vadd.f32 %v295, 1.0
  %v297 = vrcp.pop %v296
  %v298 = vmul.f32 %v296, %v297
  %v299 = vsub.f32 1.0, %v298
  %v300 = vmul.f32 %v297, %v299
  %v301 = vadd.f32 %v297, %v300
  %vm302 = vweird.f32 %v296
  %vm303 = vweird.f32 %v297
  %vm304 = vmor %vm302, %vm303
  %v305 = vsel %vm304, %v297, %v301
  %v306 = vand.u32 2147483647, %v296
  %vm307 = vcmp.eq.f32.partialorder %v306, 8.507059e+37
  %v308 = vand.u32 %v296, 2147483648
  %v309 = vor.u32 1.1754944e-38, %v308
  %v310 = vsel %vm307, %v309, %v305
  %v311 = vmul.f32 1.0, %v310
  %v312 = vtanh.pop %v292
  %v313 = vmul.f32 %v311, %v182
  %315 = vrot.lane.b32.xlu0 %v312, 32
  %v316 = vpop.permute.xlu0 %315
  %v318 = vmul.f32 %v311, %v316
  %320 = vrot.lane.b32.xlu0 %v318, 32
  %v321 = vpop.permute.xlu0 %320
  %v323 = vadd.f32 %v313, %v321
  %v324 = vtanh.pop %v323
  %326 = vrot.lane.b32.xlu0 %v324, 32
  %v327 = vpop.permute.xlu0 %326
  %v329 = vmul.f32 %v311, %v327
  %331 = vrot.lane.b32.xlu0 %v271, 64
  %v332 = vpop.permute.xlu0 %331
  %v333 = vsel %vm127, %v332, 0
  %335 = vmatpush.msra.mxu0 0.0
  %336 = vmatpush.msra.mxu0 0.0
  %337 = vmatpush.msra.mxu0 0.0
  %338 = vmatpush.msra.mxu0 0.0
  %339 = vmatpush.msra.mxu0 0.0
  %340 = vmatpush.msra.mxu0 0.0
  %341 = vmatpush.msra.mxu0 0.0
  %342 = vmatpush.msra.mxu0 0.0
  %343 = vmatpush.msra.mxu0 0.0
  %344 = vmatpush.msra.mxu0 0.0
  %345 = vmatpush.msra.mxu0 0.0
  %346 = vmatpush.msra.mxu0 0.0
  %347 = vmatpush.msra.mxu0 %v118
  %348 = vmatpush.msra.mxu0 %v117
  %349 = vmatpush.msra.mxu0 %v116
  %350 = vmatpush.msra.mxu0 %v115
  %351 = vmatmul.f32.gmra.mxu0 %v333
  %v352 = vpop.f32.mrf.mxu0
  %v353 = vadd.f32 0.0, %v352
  %354 = vdwg.mxu0
  %356 = vrot.lane.b32.xlu0 %v329, 64
  %v357 = vpop.permute.xlu0 %356
  %v358 = vsel %vm127, %v357, 0
  %360 = vmatpush.msra.mxu0 0.0
  %361 = vmatpush.msra.mxu0 0.0
  %362 = vmatpush.msra.mxu0 0.0
  %363 = vmatpush.msra.mxu0 0.0
  %364 = vmatpush.msra.mxu0 0.0
  %365 = vmatpush.msra.mxu0 0.0
  %366 = vmatpush.msra.mxu0 0.0
  %367 = vmatpush.msra.mxu0 0.0
  %368 = vmatpush.msra.mxu0 0.0
  %369 = vmatpush.msra.mxu0 0.0
  %370 = vmatpush.msra.mxu0 0.0
  %371 = vmatpush.msra.mxu0 0.0
  %372 = vmatpush.msra.mxu0 %v122
  %373 = vmatpush.msra.mxu0 %v121
  %374 = vmatpush.msra.mxu0 %v120
  %375 = vmatpush.msra.mxu0 %v119
  %376 = vmatmul.f32.gmra.mxu0 %v358
  %v377 = vpop.f32.mrf.mxu0
  %v378 = vadd.f32 %v353, %v377
  %379 = vdwg.mxu0
  %v380 = vadd.f32 %v378, %v125
  %v381 = vxor.u32 %v380, 2147483648
  %v382 = vmul.f32 %v381, 1.442695
  %v383 = vpow.pop %v382
  %v384 = vadd.f32 %v383, 1.0
  %v385 = vrcp.pop %v384
  %v386 = vmul.f32 %v384, %v385
  %v387 = vsub.f32 1.0, %v386
  %v388 = vmul.f32 %v385, %v387
  %v389 = vadd.f32 %v385, %v388
  %vm390 = vweird.f32 %v384
  %vm391 = vweird.f32 %v385
  %vm392 = vmor %vm390, %vm391
  %v393 = vsel %vm392, %v385, %v389
  %v394 = vand.u32 2147483647, %v384
  %vm395 = vcmp.eq.f32.partialorder %v394, 8.507059e+37
  %v396 = vand.u32 %v384, 2147483648
  %v397 = vor.u32 1.1754944e-38, %v396
  %v398 = vsel %vm395, %v397, %v393
  %v399 = vmul.f32 1.0, %v398
  %v400 = vtanh.pop %v380
  %v401 = vmul.f32 %v399, %v265
  %403 = vrot.lane.b32.xlu0 %v400, 32
  %v404 = vpop.permute.xlu0 %403
  %v406 = vmul.f32 %v399, %v404
  %408 = vrot.lane.b32.xlu0 %v406, 32
  %v409 = vpop.permute.xlu0 %408
  %v411 = vadd.f32 %v401, %v409
  %v412 = vtanh.pop %v411
  %414 = vrot.lane.b32.xlu0 %v412, 32
  %v415 = vpop.permute.xlu0 %414
  %v417 = vmul.f32 %v399, %v415
  %418 = vmatpush.msra.mxu0 0.0
  %419 = vmatpush.msra.mxu0 0.0
  %420 = vmatpush.msra.mxu0 0.0
  %421 = vmatpush.msra.mxu0 0.0
  %422 = vmatpush.msra.mxu0 0.0
  %423 = vmatpush.msra.mxu0 0.0
  %424 = vmatpush.msra.mxu0 0.0
  %425 = vmatpush.msra.mxu0 0.0
  %426 = vmatpush.msra.mxu0 0.0
  %427 = vmatpush.msra.mxu0 0.0
  %428 = vmatpush.msra.mxu0 0.0
  %429 = vmatpush.msra.mxu0 0.0
  %430 = vmatpush.msra.mxu0 %v114
  %431 = vmatpush.msra.mxu0 %v113
  %432 = vmatpush.msra.mxu0 %v112
  %433 = vmatpush.msra.mxu0 %v111
  %434 = vmatmul.f32.gmra.mxu0 %v358
  %v435 = vpop.f32.mrf.mxu0
  %v436 = vadd.f32 0.0, %v435
  %437 = vdwg.mxu0
  %v438 = vadd.f32 %v94, %v436
  %v439 = vxor.u32 %v438, 2147483648
  %v440 = vmul.f32 %v439, 1.442695
  %v441 = vpow.pop %v440
  %v442 = vadd.f32 %v441, 1.0
  %v443 = vrcp.pop %v442
  %v444 = vmul.f32 %v442, %v443
  %v445 = vsub.f32 1.0, %v444
  %v446 = vmul.f32 %v443, %v445
  %v447 = vadd.f32 %v443, %v446
  %vm448 = vweird.f32 %v442
  %vm449 = vweird.f32 %v443
  %vm450 = vmor %vm448, %vm449
  %v451 = vsel %vm450, %v443, %v447
  %v452 = vand.u32 2147483647, %v442
  %vm453 = vcmp.eq.f32.partialorder %v452, 8.507059e+37
  %v454 = vand.u32 %v442, 2147483648
  %v455 = vor.u32 1.1754944e-38, %v454
  %v456 = vsel %vm453, %v455, %v451
  %v457 = vmul.f32 1.0, %v456
  %v458 = vtanh.pop %v438
  %v459 = vmul.f32 %v457, %v323
  %461 = vrot.lane.b32.xlu0 %v458, 32
  %v462 = vpop.permute.xlu0 %461
  %v464 = vmul.f32 %v457, %v462
  %466 = vrot.lane.b32.xlu0 %v464, 32
  %v467 = vpop.permute.xlu0 %466
  %v469 = vadd.f32 %v459, %v467
  %v470 = vtanh.pop %v469
  %472 = vrot.lane.b32.xlu0 %v470, 32
  %v473 = vpop.permute.xlu0 %472
  %v475 = vmul.f32 %v457, %v473
  %477 = vrot.lane.b32.xlu0 %v417, 64
  %v478 = vpop.permute.xlu0 %477
  %v479 = vsel %vm127, %v478, 0
  %481 = vmatpush.msra.mxu0 0.0
  %482 = vmatpush.msra.mxu0 0.0
  %483 = vmatpush.msra.mxu0 0.0
  %484 = vmatpush.msra.mxu0 0.0
  %485 = vmatpush.msra.mxu0 0.0
  %486 = vmatpush.msra.mxu0 0.0
  %487 = vmatpush.msra.mxu0 0.0
  %488 = vmatpush.msra.mxu0 0.0
  %489 = vmatpush.msra.mxu0 0.0
  %490 = vmatpush.msra.mxu0 0.0
  %491 = vmatpush.msra.mxu0 0.0
  %492 = vmatpush.msra.mxu0 0.0
  %493 = vmatpush.msra.mxu0 %v118
  %494 = vmatpush.msra.mxu0 %v117
  %495 = vmatpush.msra.mxu0 %v116
  %496 = vmatpush.msra.mxu0 %v115
  %497 = vmatmul.f32.gmra.mxu0 %v479
  %v498 = vpop.f32.mrf.mxu0
  %v499 = vadd.f32 0.0, %v498
  %500 = vdwg.mxu0
  %502 = vrot.lane.b32.xlu0 %v475, 64
  %v503 = vpop.permute.xlu0 %502
  %v504 = vsel %vm127, %v503, 0
  %506 = vmatpush.msra.mxu0 0.0
  %507 = vmatpush.msra.mxu0 0.0
  %508 = vmatpush.msra.mxu0 0.0
  %509 = vmatpush.msra.mxu0 0.0
  %510 = vmatpush.msra.mxu0 0.0
  %511 = vmatpush.msra.mxu0 0.0
  %512 = vmatpush.msra.mxu0 0.0
  %513 = vmatpush.msra.mxu0 0.0
  %514 = vmatpush.msra.mxu0 0.0
  %515 = vmatpush.msra.mxu0 0.0
  %516 = vmatpush.msra.mxu0 0.0
  %517 = vmatpush.msra.mxu0 0.0
  %518 = vmatpush.msra.mxu0 %v122
  %519 = vmatpush.msra.mxu0 %v121
  %520 = vmatpush.msra.mxu0 %v120
  %521 = vmatpush.msra.mxu0 %v119
  %522 = vmatmul.f32.gmra.mxu0 %v504
  %v523 = vpop.f32.mrf.mxu0
  %v524 = vadd.f32 %v499, %v523
  %525 = vdwg.mxu0
  %v526 = vadd.f32 %v524, %v125
  %v527 = vxor.u32 %v526, 2147483648
  %v528 = vmul.f32 %v527, 1.442695
  %v529 = vpow.pop %v528
  %v530 = vadd.f32 %v529, 1.0
  %v531 = vrcp.pop %v530
  %v532 = vmul.f32 %v530, %v531
  %v533 = vsub.f32 1.0, %v532
  %v534 = vmul.f32 %v531, %v533
  %v535 = vadd.f32 %v531, %v534
  %vm536 = vweird.f32 %v530
  %vm537 = vweird.f32 %v531
  %vm538 = vmor %vm536, %vm537
  %v539 = vsel %vm538, %v531, %v535
  %v540 = vand.u32 2147483647, %v530
  %vm541 = vcmp.eq.f32.partialorder %v540, 8.507059e+37
  %v542 = vand.u32 %v530, 2147483648
  %v543 = vor.u32 1.1754944e-38, %v542
  %v544 = vsel %vm541, %v543, %v539
  %v545 = vmul.f32 1.0, %v544
  %v546 = vtanh.pop %v526
  %v547 = vmul.f32 %v545, %v411
  %549 = vrot.lane.b32.xlu0 %v546, 32
  %v550 = vpop.permute.xlu0 %549
  %v552 = vmul.f32 %v545, %v550
  %554 = vrot.lane.b32.xlu0 %v552, 32
  %v555 = vpop.permute.xlu0 %554
  %v557 = vadd.f32 %v547, %v555
  %v558 = vtanh.pop %v557
  %560 = vrot.lane.b32.xlu0 %v558, 32
  %v561 = vpop.permute.xlu0 %560
  %v563 = vmul.f32 %v545, %v561
  %564 = vmatpush.msra.mxu0 0.0
  %565 = vmatpush.msra.mxu0 0.0
  %566 = vmatpush.msra.mxu0 0.0
  %567 = vmatpush.msra.mxu0 0.0
  %568 = vmatpush.msra.mxu0 0.0
  %569 = vmatpush.msra.mxu0 0.0
  %570 = vmatpush.msra.mxu0 0.0
  %571 = vmatpush.msra.mxu0 0.0
  %572 = vmatpush.msra.mxu0 0.0
  %573 = vmatpush.msra.mxu0 0.0
  %574 = vmatpush.msra.mxu0 0.0
  %575 = vmatpush.msra.mxu0 0.0
  %576 = vmatpush.msra.mxu0 %v114
  %577 = vmatpush.msra.mxu0 %v113
  %578 = vmatpush.msra.mxu0 %v112
  %579 = vmatpush.msra.mxu0 %v111
  %580 = vmatmul.f32.gmra.mxu0 %v504
  %v581 = vpop.f32.mrf.mxu0
  %v582 = vadd.f32 0.0, %v581
  %583 = vdwg.mxu0
  %v584 = vadd.f32 %v97, %v582
  %v585 = vxor.u32 %v584, 2147483648
  %v586 = vmul.f32 %v585, 1.442695
  %v587 = vpow.pop %v586
  %v588 = vadd.f32 %v587, 1.0
  %v589 = vrcp.pop %v588
  %v590 = vmul.f32 %v588, %v589
  %v591 = vsub.f32 1.0, %v590
  %v592 = vmul.f32 %v589, %v591
  %v593 = vadd.f32 %v589, %v592
  %vm594 = vweird.f32 %v588
  %vm595 = vweird.f32 %v589
  %vm596 = vmor %vm594, %vm595
  %v597 = vsel %vm596, %v589, %v593
  %v598 = vand.u32 2147483647, %v588
  %vm599 = vcmp.eq.f32.partialorder %v598, 8.507059e+37
  %v600 = vand.u32 %v588, 2147483648
  %v601 = vor.u32 1.1754944e-38, %v600
  %v602 = vsel %vm599, %v601, %v597
  %v603 = vmul.f32 1.0, %v602
  %v604 = vtanh.pop %v584
  %v605 = vmul.f32 %v603, %v469
  %607 = vrot.lane.b32.xlu0 %v604, 32
  %v608 = vpop.permute.xlu0 %607
  %v610 = vmul.f32 %v603, %v608
  %612 = vrot.lane.b32.xlu0 %v610, 32
  %v613 = vpop.permute.xlu0 %612
  %v615 = vadd.f32 %v605, %v613
  %v616 = vtanh.pop %v615
  %618 = vrot.lane.b32.xlu0 %v616, 32
  %v619 = vpop.permute.xlu0 %618
  %v621 = vmul.f32 %v603, %v619
  %623 = vrot.lane.b32.xlu0 %v563, 64
  %v624 = vpop.permute.xlu0 %623
  %v625 = vsel %vm127, %v624, 0
  %627 = vmatpush.msra.mxu0 0.0
  %628 = vmatpush.msra.mxu0 0.0
  %629 = vmatpush.msra.mxu0 0.0
  %630 = vmatpush.msra.mxu0 0.0
  %631 = vmatpush.msra.mxu0 0.0
  %632 = vmatpush.msra.mxu0 0.0
  %633 = vmatpush.msra.mxu0 0.0
  %634 = vmatpush.msra.mxu0 0.0
  %635 = vmatpush.msra.mxu0 0.0
  %636 = vmatpush.msra.mxu0 0.0
  %637 = vmatpush.msra.mxu0 0.0
  %638 = vmatpush.msra.mxu0 0.0
  %639 = vmatpush.msra.mxu0 %v118
  %640 = vmatpush.msra.mxu0 %v117
  %641 = vmatpush.msra.mxu0 %v116
  %642 = vmatpush.msra.mxu0 %v115
  %643 = vmatmul.f32.gmra.mxu0 %v625
  %v644 = vpop.f32.mrf.mxu0
  %v645 = vadd.f32 0.0, %v644
  %646 = vdwg.mxu0
  %648 = vrot.lane.b32.xlu0 %v621, 64
  %v649 = vpop.permute.xlu0 %648
  %v650 = vsel %vm127, %v649, 0
  %652 = vmatpush.msra.mxu0 0.0
  %653 = vmatpush.msra.mxu0 0.0
  %654 = vmatpush.msra.mxu0 0.0
  %655 = vmatpush.msra.mxu0 0.0
  %656 = vmatpush.msra.mxu0 0.0
  %657 = vmatpush.msra.mxu0 0.0
  %658 = vmatpush.msra.mxu0 0.0
  %659 = vmatpush.msra.mxu0 0.0
  %660 = vmatpush.msra.mxu0 0.0
  %661 = vmatpush.msra.mxu0 0.0
  %662 = vmatpush.msra.mxu0 0.0
  %663 = vmatpush.msra.mxu0 0.0
  %664 = vmatpush.msra.mxu0 %v122
  %665 = vmatpush.msra.mxu0 %v121
  %666 = vmatpush.msra.mxu0 %v120
  %667 = vmatpush.msra.mxu0 %v119
  %668 = vmatmul.f32.gmra.mxu0 %v650
  %v669 = vpop.f32.mrf.mxu0
  %v670 = vadd.f32 %v645, %v669
  %671 = vdwg.mxu0
  %v672 = vadd.f32 %v670, %v125
  %v673 = vxor.u32 %v672, 2147483648
  %v674 = vmul.f32 %v673, 1.442695
  %v675 = vpow.pop %v674
  %v676 = vadd.f32 %v675, 1.0
  %v677 = vrcp.pop %v676
  %v678 = vmul.f32 %v676, %v677
  %v679 = vsub.f32 1.0, %v678
  %v680 = vmul.f32 %v677, %v679
  %v681 = vadd.f32 %v677, %v680
  %vm682 = vweird.f32 %v676
  %vm683 = vweird.f32 %v677
  %vm684 = vmor %vm682, %vm683
  %v685 = vsel %vm684, %v677, %v681
  %v686 = vand.u32 2147483647, %v676
  %vm687 = vcmp.eq.f32.partialorder %v686, 8.507059e+37
  %v688 = vand.u32 %v676, 2147483648
  %v689 = vor.u32 1.1754944e-38, %v688
  %v690 = vsel %vm687, %v689, %v685
  %v691 = vmul.f32 1.0, %v690
  %v692 = vtanh.pop %v672
  %v693 = vmul.f32 %v691, %v557
  %695 = vrot.lane.b32.xlu0 %v692, 32
  %v696 = vpop.permute.xlu0 %695
  %v698 = vmul.f32 %v691, %v696
  %700 = vrot.lane.b32.xlu0 %v698, 32
  %v701 = vpop.permute.xlu0 %700
  %v703 = vadd.f32 %v693, %v701
  %v704 = vtanh.pop %v703
  %706 = vrot.lane.b32.xlu0 %v704, 32
  %v707 = vpop.permute.xlu0 %706
  %v709 = vmul.f32 %v691, %v707
  %710 = vmatpush.msra.mxu0 0.0
  %711 = vmatpush.msra.mxu0 0.0
  %712 = vmatpush.msra.mxu0 0.0
  %713 = vmatpush.msra.mxu0 0.0
  %714 = vmatpush.msra.mxu0 0.0
  %715 = vmatpush.msra.mxu0 0.0
  %716 = vmatpush.msra.mxu0 0.0
  %717 = vmatpush.msra.mxu0 0.0
  %718 = vmatpush.msra.mxu0 0.0
  %719 = vmatpush.msra.mxu0 0.0
  %720 = vmatpush.msra.mxu0 0.0
  %721 = vmatpush.msra.mxu0 0.0
  %722 = vmatpush.msra.mxu0 %v114
  %723 = vmatpush.msra.mxu0 %v113
  %724 = vmatpush.msra.mxu0 %v112
  %725 = vmatpush.msra.mxu0 %v111
  %726 = vmatmul.f32.gmra.mxu0 %v650
  %v727 = vpop.f32.mrf.mxu0
  %v728 = vadd.f32 0.0, %v727
  %729 = vdwg.mxu0
  %v730 = vadd.f32 %v100, %v728
  %v731 = vxor.u32 %v730, 2147483648
  %v732 = vmul.f32 %v731, 1.442695
  %v733 = vpow.pop %v732
  %v734 = vadd.f32 %v733, 1.0
  %v735 = vrcp.pop %v734
  %v736 = vmul.f32 %v734, %v735
  %v737 = vsub.f32 1.0, %v736
  %v738 = vmul.f32 %v735, %v737
  %v739 = vadd.f32 %v735, %v738
  %vm740 = vweird.f32 %v734
  %vm741 = vweird.f32 %v735
  %vm742 = vmor %vm740, %vm741
  %v743 = vsel %vm742, %v735, %v739
  %v744 = vand.u32 2147483647, %v734
  %vm745 = vcmp.eq.f32.partialorder %v744, 8.507059e+37
  %v746 = vand.u32 %v734, 2147483648
  %v747 = vor.u32 1.1754944e-38, %v746
  %v748 = vsel %vm745, %v747, %v743
  %v749 = vmul.f32 1.0, %v748
  %v750 = vtanh.pop %v730
  %v751 = vmul.f32 %v749, %v615
  %753 = vrot.lane.b32.xlu0 %v750, 32
  %v754 = vpop.permute.xlu0 %753
  %v756 = vmul.f32 %v749, %v754
  %758 = vrot.lane.b32.xlu0 %v756, 32
  %v759 = vpop.permute.xlu0 %758
  %v761 = vadd.f32 %v751, %v759
  %v762 = vtanh.pop %v761
  %764 = vrot.lane.b32.xlu0 %v762, 32
  %v765 = vpop.permute.xlu0 %764
  %v767 = vmul.f32 %v749, %v765
  %769 = vrot.lane.b32.xlu0 %v709, 64
  %v770 = vpop.permute.xlu0 %769
  %v771 = vsel %vm127, %v770, 0
  %773 = vmatpush.msra.mxu0 0.0
  %774 = vmatpush.msra.mxu0 0.0
  %775 = vmatpush.msra.mxu0 0.0
  %776 = vmatpush.msra.mxu0 0.0
  %777 = vmatpush.msra.mxu0 0.0
  %778 = vmatpush.msra.mxu0 0.0
  %779 = vmatpush.msra.mxu0 0.0
  %780 = vmatpush.msra.mxu0 0.0
  %781 = vmatpush.msra.mxu0 0.0
  %782 = vmatpush.msra.mxu0 0.0
  %783 = vmatpush.msra.mxu0 0.0
  %784 = vmatpush.msra.mxu0 0.0
  %785 = vmatpush.msra.mxu0 %v118
  %786 = vmatpush.msra.mxu0 %v117
  %787 = vmatpush.msra.mxu0 %v116
  %788 = vmatpush.msra.mxu0 %v115
  %789 = vmatmul.f32.gmra.mxu0 %v771
  %v790 = vpop.f32.mrf.mxu0
  %v791 = vadd.f32 0.0, %v790
  %792 = vdwg.mxu0
  %794 = vrot.lane.b32.xlu0 %v767, 64
  %v795 = vpop.permute.xlu0 %794
  %v796 = vsel %vm127, %v795, 0
  %798 = vmatpush.msra.mxu0 0.0
  %799 = vmatpush.msra.mxu0 0.0
  %800 = vmatpush.msra.mxu0 0.0
  %801 = vmatpush.msra.mxu0 0.0
  %802 = vmatpush.msra.mxu0 0.0
  %803 = vmatpush.msra.mxu0 0.0
  %804 = vmatpush.msra.mxu0 0.0
  %805 = vmatpush.msra.mxu0 0.0
  %806 = vmatpush.msra.mxu0 0.0
  %807 = vmatpush.msra.mxu0 0.0
  %808 = vmatpush.msra.mxu0 0.0
  %809 = vmatpush.msra.mxu0 0.0
  %810 = vmatpush.msra.mxu0 %v122
  %811 = vmatpush.msra.mxu0 %v121
  %812 = vmatpush.msra.mxu0 %v120
  %813 = vmatpush.msra.mxu0 %v119
  %814 = vmatmul.f32.gmra.mxu0 %v796
  %v815 = vpop.f32.mrf.mxu0
  %v816 = vadd.f32 %v791, %v815
  %817 = vdwg.mxu0
  %v818 = vadd.f32 %v816, %v125
  %v819 = vxor.u32 %v818, 2147483648
  %v820 = vmul.f32 %v819, 1.442695
  %v821 = vpow.pop %v820
  %v822 = vadd.f32 %v821, 1.0
  %v823 = vrcp.pop %v822
  %v824 = vmul.f32 %v822, %v823
  %v825 = vsub.f32 1.0, %v824
  %v826 = vmul.f32 %v823, %v825
  %v827 = vadd.f32 %v823, %v826
  %vm828 = vweird.f32 %v822
  %vm829 = vweird.f32 %v823
  %vm830 = vmor %vm828, %vm829
  %v831 = vsel %vm830, %v823, %v827
  %v832 = vand.u32 2147483647, %v822
  %vm833 = vcmp.eq.f32.partialorder %v832, 8.507059e+37
  %v834 = vand.u32 %v822, 2147483648
  %v835 = vor.u32 1.1754944e-38, %v834
  %v836 = vsel %vm833, %v835, %v831
  %v837 = vmul.f32 1.0, %v836
  %v838 = vtanh.pop %v818
  %v839 = vmul.f32 %v837, %v703
  %841 = vrot.lane.b32.xlu0 %v838, 32
  %v842 = vpop.permute.xlu0 %841
  %v844 = vmul.f32 %v837, %v842
  %846 = vrot.lane.b32.xlu0 %v844, 32
  %v847 = vpop.permute.xlu0 %846
  %v849 = vadd.f32 %v839, %v847
  %v850 = vtanh.pop %v849
  %852 = vrot.lane.b32.xlu0 %v850, 32
  %v853 = vpop.permute.xlu0 %852
  %v855 = vmul.f32 %v837, %v853
  %856 = vmatpush.msra.mxu0 0.0
  %857 = vmatpush.msra.mxu0 0.0
  %858 = vmatpush.msra.mxu0 0.0
  %859 = vmatpush.msra.mxu0 0.0
  %860 = vmatpush.msra.mxu0 0.0
  %861 = vmatpush.msra.mxu0 0.0
  %862 = vmatpush.msra.mxu0 0.0
  %863 = vmatpush.msra.mxu0 0.0
  %864 = vmatpush.msra.mxu0 0.0
  %865 = vmatpush.msra.mxu0 0.0
  %866 = vmatpush.msra.mxu0 0.0
  %867 = vmatpush.msra.mxu0 0.0
  %868 = vmatpush.msra.mxu0 %v114
  %869 = vmatpush.msra.mxu0 %v113
  %870 = vmatpush.msra.mxu0 %v112
  %871 = vmatpush.msra.mxu0 %v111
  %872 = vmatmul.f32.gmra.mxu0 %v796
  %v873 = vpop.f32.mrf.mxu0
  %v874 = vadd.f32 0.0, %v873
  %875 = vdwg.mxu0
  %v876 = vadd.f32 %v103, %v874
  %v877 = vxor.u32 %v876, 2147483648
  %v878 = vmul.f32 %v877, 1.442695
  %v879 = vpow.pop %v878
  %v880 = vadd.f32 %v879, 1.0
  %v881 = vrcp.pop %v880
  %v882 = vmul.f32 %v880, %v881
  %v883 = vsub.f32 1.0, %v882
  %v884 = vmul.f32 %v881, %v883
  %v885 = vadd.f32 %v881, %v884
  %vm886 = vweird.f32 %v880
  %vm887 = vweird.f32 %v881
  %vm888 = vmor %vm886, %vm887
  %v889 = vsel %vm888, %v881, %v885
  %v890 = vand.u32 2147483647, %v880
  %vm891 = vcmp.eq.f32.partialorder %v890, 8.507059e+37
  %v892 = vand.u32 %v880, 2147483648
  %v893 = vor.u32 1.1754944e-38, %v892
  %v894 = vsel %vm891, %v893, %v889
  %v895 = vmul.f32 1.0, %v894
  %v896 = vtanh.pop %v876
  %v897 = vmul.f32 %v895, %v761
  %899 = vrot.lane.b32.xlu0 %v896, 32
  %v900 = vpop.permute.xlu0 %899
  %v902 = vmul.f32 %v895, %v900
  %904 = vrot.lane.b32.xlu0 %v902, 32
  %v905 = vpop.permute.xlu0 %904
  %v907 = vadd.f32 %v897, %v905
  %v908 = vtanh.pop %v907
  %910 = vrot.lane.b32.xlu0 %v908, 32
  %v911 = vpop.permute.xlu0 %910
  %v913 = vmul.f32 %v895, %v911
  %915 = vrot.lane.b32.xlu0 %v855, 64
  %v916 = vpop.permute.xlu0 %915
  %v917 = vsel %vm127, %v916, 0
  %919 = vmatpush.msra.mxu0 0.0
  %920 = vmatpush.msra.mxu0 0.0
  %921 = vmatpush.msra.mxu0 0.0
  %922 = vmatpush.msra.mxu0 0.0
  %923 = vmatpush.msra.mxu0 0.0
  %924 = vmatpush.msra.mxu0 0.0
  %925 = vmatpush.msra.mxu0 0.0
  %926 = vmatpush.msra.mxu0 0.0
  %927 = vmatpush.msra.mxu0 0.0
  %928 = vmatpush.msra.mxu0 0.0
  %929 = vmatpush.msra.mxu0 0.0
  %930 = vmatpush.msra.mxu0 0.0
  %931 = vmatpush.msra.mxu0 %v118
  %932 = vmatpush.msra.mxu0 %v117
  %933 = vmatpush.msra.mxu0 %v116
  %934 = vmatpush.msra.mxu0 %v115
  %935 = vmatmul.f32.gmra.mxu0 %v917
  %v936 = vpop.f32.mrf.mxu0
  %v937 = vadd.f32 0.0, %v936
  %938 = vdwg.mxu0
  %940 = vrot.lane.b32.xlu0 %v913, 64
  %v941 = vpop.permute.xlu0 %940
  %v942 = vsel %vm127, %v941, 0
  %944 = vmatpush.msra.mxu0 0.0
  %945 = vmatpush.msra.mxu0 0.0
  %946 = vmatpush.msra.mxu0 0.0
  %947 = vmatpush.msra.mxu0 0.0
  %948 = vmatpush.msra.mxu0 0.0
  %949 = vmatpush.msra.mxu0 0.0
  %950 = vmatpush.msra.mxu0 0.0
  %951 = vmatpush.msra.mxu0 0.0
  %952 = vmatpush.msra.mxu0 0.0
  %953 = vmatpush.msra.mxu0 0.0
  %954 = vmatpush.msra.mxu0 0.0
  %955 = vmatpush.msra.mxu0 0.0
  %956 = vmatpush.msra.mxu0 %v122
  %957 = vmatpush.msra.mxu0 %v121
  %958 = vmatpush.msra.mxu0 %v120
  %959 = vmatpush.msra.mxu0 %v119
  %960 = vmatmul.f32.gmra.mxu0 %v942
  %v961 = vpop.f32.mrf.mxu0
  %v962 = vadd.f32 %v937, %v961
  %963 = vdwg.mxu0
  %v964 = vadd.f32 %v962, %v125
  %v965 = vxor.u32 %v964, 2147483648
  %v966 = vmul.f32 %v965, 1.442695
  %v967 = vpow.pop %v966
  %v968 = vadd.f32 %v967, 1.0
  %v969 = vrcp.pop %v968
  %v970 = vmul.f32 %v968, %v969
  %v971 = vsub.f32 1.0, %v970
  %v972 = vmul.f32 %v969, %v971
  %v973 = vadd.f32 %v969, %v972
  %vm974 = vweird.f32 %v968
  %vm975 = vweird.f32 %v969
  %vm976 = vmor %vm974, %vm975
  %v977 = vsel %vm976, %v969, %v973
  %v978 = vand.u32 2147483647, %v968
  %vm979 = vcmp.eq.f32.partialorder %v978, 8.507059e+37
  %v980 = vand.u32 %v968, 2147483648
  %v981 = vor.u32 1.1754944e-38, %v980
  %v982 = vsel %vm979, %v981, %v977
  %v983 = vmul.f32 1.0, %v982
  %v984 = vtanh.pop %v964
  %v985 = vmul.f32 %v983, %v849
  %987 = vrot.lane.b32.xlu0 %v984, 32
  %v988 = vpop.permute.xlu0 %987
  %v990 = vmul.f32 %v983, %v988
  %992 = vrot.lane.b32.xlu0 %v990, 32
  %v993 = vpop.permute.xlu0 %992
  %v995 = vadd.f32 %v985, %v993
  %v996 = vtanh.pop %v995
  %998 = vrot.lane.b32.xlu0 %v996, 32
  %v999 = vpop.permute.xlu0 %998
  %v1001 = vmul.f32 %v983, %v999
  %1002 = vmatpush.msra.mxu0 0.0
  %1003 = vmatpush.msra.mxu0 0.0
  %1004 = vmatpush.msra.mxu0 0.0
  %1005 = vmatpush.msra.mxu0 0.0
  %1006 = vmatpush.msra.mxu0 0.0
  %1007 = vmatpush.msra.mxu0 0.0
  %1008 = vmatpush.msra.mxu0 0.0
  %1009 = vmatpush.msra.mxu0 0.0
  %1010 = vmatpush.msra.mxu0 0.0
  %1011 = vmatpush.msra.mxu0 0.0
  %1012 = vmatpush.msra.mxu0 0.0
  %1013 = vmatpush.msra.mxu0 0.0
  %1014 = vmatpush.msra.mxu0 %v114
  %1015 = vmatpush.msra.mxu0 %v113
  %1016 = vmatpush.msra.mxu0 %v112
  %1017 = vmatpush.msra.mxu0 %v111
  %1018 = vmatmul.f32.gmra.mxu0 %v942
  %v1019 = vpop.f32.mrf.mxu0
  %v1020 = vadd.f32 0.0, %v1019
  %1021 = vdwg.mxu0
  %v1022 = vadd.f32 %v106, %v1020
  %v1023 = vxor.u32 %v1022, 2147483648
  %v1024 = vmul.f32 %v1023, 1.442695
  %v1025 = vpow.pop %v1024
  %v1026 = vadd.f32 %v1025, 1.0
  %v1027 = vrcp.pop %v1026
  %v1028 = vmul.f32 %v1026, %v1027
  %v1029 = vsub.f32 1.0, %v1028
  %v1030 = vmul.f32 %v1027, %v1029
  %v1031 = vadd.f32 %v1027, %v1030
  %vm1032 = vweird.f32 %v1026
  %vm1033 = vweird.f32 %v1027
  %vm1034 = vmor %vm1032, %vm1033
  %v1035 = vsel %vm1034, %v1027, %v1031
  %v1036 = vand.u32 2147483647, %v1026
  %vm1037 = vcmp.eq.f32.partialorder %v1036, 8.507059e+37
  %v1038 = vand.u32 %v1026, 2147483648
  %v1039 = vor.u32 1.1754944e-38, %v1038
  %v1040 = vsel %vm1037, %v1039, %v1035
  %v1041 = vmul.f32 1.0, %v1040
  %v1042 = vtanh.pop %v1022
  %v1043 = vmul.f32 %v1041, %v907
  %1045 = vrot.lane.b32.xlu0 %v1042, 32
  %v1046 = vpop.permute.xlu0 %1045
  %v1048 = vmul.f32 %v1041, %v1046
  %1050 = vrot.lane.b32.xlu0 %v1048, 32
  %v1051 = vpop.permute.xlu0 %1050
  %v1053 = vadd.f32 %v1043, %v1051
  %v1054 = vtanh.pop %v1053
  %1056 = vrot.lane.b32.xlu0 %v1054, 32
  %v1057 = vpop.permute.xlu0 %1056
  %v1059 = vmul.f32 %v1041, %v1057
  %1061 = vrot.lane.b32.xlu0 %v1001, 64
  %v1062 = vpop.permute.xlu0 %1061
  %v1063 = vsel %vm127, %v1062, 0
  %1065 = vmatpush.msra.mxu0 0.0
  %1066 = vmatpush.msra.mxu0 0.0
  %1067 = vmatpush.msra.mxu0 0.0
  %1068 = vmatpush.msra.mxu0 0.0
  %1069 = vmatpush.msra.mxu0 0.0
  %1070 = vmatpush.msra.mxu0 0.0
  %1071 = vmatpush.msra.mxu0 0.0
  %1072 = vmatpush.msra.mxu0 0.0
  %1073 = vmatpush.msra.mxu0 0.0
  %1074 = vmatpush.msra.mxu0 0.0
  %1075 = vmatpush.msra.mxu0 0.0
  %1076 = vmatpush.msra.mxu0 0.0
  %1077 = vmatpush.msra.mxu0 %v118
  %1078 = vmatpush.msra.mxu0 %v117
  %1079 = vmatpush.msra.mxu0 %v116
  %1080 = vmatpush.msra.mxu0 %v115
  %1081 = vmatmul.f32.gmra.mxu0 %v1063
  %v1082 = vpop.f32.mrf.mxu0
  %v1083 = vadd.f32 0.0, %v1082
  %1084 = vdwg.mxu0
  %1086 = vrot.lane.b32.xlu0 %v1059, 64
  %v1087 = vpop.permute.xlu0 %1086
  %v1088 = vsel %vm127, %v1087, 0
  %1090 = vmatpush.msra.mxu0 0.0
  %1091 = vmatpush.msra.mxu0 0.0
  %1092 = vmatpush.msra.mxu0 0.0
  %1093 = vmatpush.msra.mxu0 0.0
  %1094 = vmatpush.msra.mxu0 0.0
  %1095 = vmatpush.msra.mxu0 0.0
  %1096 = vmatpush.msra.mxu0 0.0
  %1097 = vmatpush.msra.mxu0 0.0
  %1098 = vmatpush.msra.mxu0 0.0
  %1099 = vmatpush.msra.mxu0 0.0
  %1100 = vmatpush.msra.mxu0 0.0
  %1101 = vmatpush.msra.mxu0 0.0
  %1102 = vmatpush.msra.mxu0 %v122
  %1103 = vmatpush.msra.mxu0 %v121
  %1104 = vmatpush.msra.mxu0 %v120
  %1105 = vmatpush.msra.mxu0 %v119
  %1106 = vmatmul.f32.gmra.mxu0 %v1088
  %v1107 = vpop.f32.mrf.mxu0
  %v1108 = vadd.f32 %v1083, %v1107
  %1109 = vdwg.mxu0
  %v1110 = vadd.f32 %v1108, %v125
  %v1111 = vxor.u32 %v1110, 2147483648
  %v1112 = vmul.f32 %v1111, 1.442695
  %v1113 = vpow.pop %v1112
  %v1114 = vadd.f32 %v1113, 1.0
  %v1115 = vrcp.pop %v1114
  %v1116 = vmul.f32 %v1114, %v1115
  %v1117 = vsub.f32 1.0, %v1116
  %v1118 = vmul.f32 %v1115, %v1117
  %v1119 = vadd.f32 %v1115, %v1118
  %vm1120 = vweird.f32 %v1114
  %vm1121 = vweird.f32 %v1115
  %vm1122 = vmor %vm1120, %vm1121
  %v1123 = vsel %vm1122, %v1115, %v1119
  %v1124 = vand.u32 2147483647, %v1114
  %vm1125 = vcmp.eq.f32.partialorder %v1124, 8.507059e+37
  %v1126 = vand.u32 %v1114, 2147483648
  %v1127 = vor.u32 1.1754944e-38, %v1126
  %v1128 = vsel %vm1125, %v1127, %v1123
  %v1129 = vmul.f32 1.0, %v1128
  %v1130 = vtanh.pop %v1110
  %v1131 = vmul.f32 %v1129, %v995
  %1133 = vrot.lane.b32.xlu0 %v1130, 32
  %v1134 = vpop.permute.xlu0 %1133
  %v1136 = vmul.f32 %v1129, %v1134
  %1138 = vrot.lane.b32.xlu0 %v1136, 32
  %v1139 = vpop.permute.xlu0 %1138
  %v1141 = vadd.f32 %v1131, %v1139
  %v1142 = vtanh.pop %v1141
  %1144 = vrot.lane.b32.xlu0 %v1142, 32
  %v1145 = vpop.permute.xlu0 %1144
  %v1147 = vmul.f32 %v1129, %v1145
  %1148 = vmatpush.msra.mxu0 0.0
  %1149 = vmatpush.msra.mxu0 0.0
  %1150 = vmatpush.msra.mxu0 0.0
  %1151 = vmatpush.msra.mxu0 0.0
  %1152 = vmatpush.msra.mxu0 0.0
  %1153 = vmatpush.msra.mxu0 0.0
  %1154 = vmatpush.msra.mxu0 0.0
  %1155 = vmatpush.msra.mxu0 0.0
  %1156 = vmatpush.msra.mxu0 0.0
  %1157 = vmatpush.msra.mxu0 0.0
  %1158 = vmatpush.msra.mxu0 0.0
  %1159 = vmatpush.msra.mxu0 0.0
  %1160 = vmatpush.msra.mxu0 %v114
  %1161 = vmatpush.msra.mxu0 %v113
  %1162 = vmatpush.msra.mxu0 %v112
  %1163 = vmatpush.msra.mxu0 %v111
  %1164 = vmatmul.f32.gmra.mxu0 %v1088
  %v1165 = vpop.f32.mrf.mxu0
  %v1166 = vadd.f32 0.0, %v1165
  %1167 = vdwg.mxu0
  %v1168 = vadd.f32 %v109, %v1166
  %v1169 = vxor.u32 %v1168, 2147483648
  %v1170 = vmul.f32 %v1169, 1.442695
  %v1171 = vpow.pop %v1170
  %v1172 = vadd.f32 %v1171, 1.0
  %v1173 = vrcp.pop %v1172
  %v1174 = vmul.f32 %v1172, %v1173
  %v1175 = vsub.f32 1.0, %v1174
  %v1176 = vmul.f32 %v1173, %v1175
  %v1177 = vadd.f32 %v1173, %v1176
  %vm1178 = vweird.f32 %v1172
  %vm1179 = vweird.f32 %v1173
  %vm1180 = vmor %vm1178, %vm1179
  %v1181 = vsel %vm1180, %v1173, %v1177
  %v1182 = vand.u32 2147483647, %v1172
  %vm1183 = vcmp.eq.f32.partialorder %v1182, 8.507059e+37
  %v1184 = vand.u32 %v1172, 2147483648
  %v1185 = vor.u32 1.1754944e-38, %v1184
  %v1186 = vsel %vm1183, %v1185, %v1181
  %v1187 = vmul.f32 1.0, %v1186
  %v1188 = vtanh.pop %v1168
  %v1189 = vmul.f32 %v1187, %v1053
  %1191 = vrot.lane.b32.xlu0 %v1188, 32
  %v1192 = vpop.permute.xlu0 %1191
  %v1194 = vmul.f32 %v1187, %v1192
  %1196 = vrot.lane.b32.xlu0 %v1194, 32
  %v1197 = vpop.permute.xlu0 %1196
  %v1199 = vadd.f32 %v1189, %v1197
  %v1200 = vtanh.pop %v1199
  %1202 = vrot.lane.b32.xlu0 %v1200, 32
  %v1203 = vpop.permute.xlu0 %1202
  %v1205 = vmul.f32 %v1187, %v1203
  %1207 = vrot.lane.b32.xlu0 %v1147, 64
  %v1208 = vpop.permute.xlu0 %1207
  %v1209 = vsel %vm127, %v1208, 0
  %1211 = vmatpush.msra.mxu0 0.0
  %1212 = vmatpush.msra.mxu0 0.0
  %1213 = vmatpush.msra.mxu0 0.0
  %1214 = vmatpush.msra.mxu0 0.0
  %1215 = vmatpush.msra.mxu0 0.0
  %1216 = vmatpush.msra.mxu0 0.0
  %1217 = vmatpush.msra.mxu0 0.0
  %1218 = vmatpush.msra.mxu0 0.0
  %1219 = vmatpush.msra.mxu0 0.0
  %1220 = vmatpush.msra.mxu0 0.0
  %1221 = vmatpush.msra.mxu0 0.0
  %1222 = vmatpush.msra.mxu0 0.0
  %1223 = vmatpush.msra.mxu0 %v118
  %1224 = vmatpush.msra.mxu0 %v117
  %1225 = vmatpush.msra.mxu0 %v116
  %1226 = vmatpush.msra.mxu0 %v115
  %1227 = vmatmul.f32.gmra.mxu0 %v1209
  %v1228 = vpop.f32.mrf.mxu0
  %v1229 = vadd.f32 0.0, %v1228
  %1230 = vdwg.mxu0
  %1232 = vrot.lane.b32.xlu0 %v1205, 64
  %v1233 = vpop.permute.xlu0 %1232
  %v1234 = vsel %vm127, %v1233, 0
  %1236 = vmatpush.msra.mxu0 0.0
  %1237 = vmatpush.msra.mxu0 0.0
  %1238 = vmatpush.msra.mxu0 0.0
  %1239 = vmatpush.msra.mxu0 0.0
  %1240 = vmatpush.msra.mxu0 0.0
  %1241 = vmatpush.msra.mxu0 0.0
  %1242 = vmatpush.msra.mxu0 0.0
  %1243 = vmatpush.msra.mxu0 0.0
  %1244 = vmatpush.msra.mxu0 0.0
  %1245 = vmatpush.msra.mxu0 0.0
  %1246 = vmatpush.msra.mxu0 0.0
  %1247 = vmatpush.msra.mxu0 0.0
  %1248 = vmatpush.msra.mxu0 %v122
  %1249 = vmatpush.msra.mxu0 %v121
  %1250 = vmatpush.msra.mxu0 %v120
  %1251 = vmatpush.msra.mxu0 %v119
  %1252 = vmatmul.f32.gmra.mxu0 %v1234
  %v1253 = vpop.f32.mrf.mxu0
  %v1254 = vadd.f32 %v1229, %v1253
  %1255 = vdwg.mxu0
  %v1256 = vadd.f32 %v1254, %v125
  %v1257 = vxor.u32 %v1256, 2147483648
  %v1258 = vmul.f32 %v1257, 1.442695
  %v1259 = vpow.pop %v1258
  %v1260 = vadd.f32 %v1259, 1.0
  %v1261 = vrcp.pop %v1260
  %v1262 = vmul.f32 %v1260, %v1261
  %v1263 = vsub.f32 1.0, %v1262
  %v1264 = vmul.f32 %v1261, %v1263
  %v1265 = vadd.f32 %v1261, %v1264
  %vm1266 = vweird.f32 %v1260
  %vm1267 = vweird.f32 %v1261
  %vm1268 = vmor %vm1266, %vm1267
  %v1269 = vsel %vm1268, %v1261, %v1265
  %v1270 = vand.u32 2147483647, %v1260
  %vm1271 = vcmp.eq.f32.partialorder %v1270, 8.507059e+37
  %v1272 = vand.u32 %v1260, 2147483648
  %v1273 = vor.u32 1.1754944e-38, %v1272
  %v1274 = vsel %vm1271, %v1273, %v1269
  %v1275 = vmul.f32 1.0, %v1274
  %v1276 = vtanh.pop %v1256
  %v1277 = vmul.f32 %v1275, %v1141
  %1279 = vrot.lane.b32.xlu0 %v1276, 32
  %v1280 = vpop.permute.xlu0 %1279
  %v1282 = vmul.f32 %v1275, %v1280
  %1284 = vrot.lane.b32.xlu0 %v1282, 32
  %v1285 = vpop.permute.xlu0 %1284
  %v1287 = vadd.f32 %v1277, %v1285
  %v1288 = vtanh.pop %v1287
  %1290 = vrot.lane.b32.xlu0 %v1288, 32
  %v1291 = vpop.permute.xlu0 %1290
  %v1293 = vmul.f32 %v1275, %v1291
  %v1294 = vld [vmem:[%s7] sm:$0xff]
  %v1295 = vld [vmem:[%s7 + $0x8] sm:$0xff]
  %v1296 = vld [vmem:[%s7 + $0x10] sm:$0xff]
  %v1297 = vld [vmem:[%s7 + $0x18] sm:$0xff]
  %v1298 = vld [vmem:[%s8] sm:$0x1]
  %v1300 = vperm.slane %v1298, 0
  %1303 = vrot.lane.b32.xlu0 %v1293, 64
  %v1304 = vpop.permute.xlu0 %1303
  %v1305 = vsel %vm127, %v1304, 0
  %1307 = vmatpush.msra.mxu0 0.0
  %1308 = vmatpush.msra.mxu0 0.0
  %1309 = vmatpush.msra.mxu0 0.0
  %1310 = vmatpush.msra.mxu0 0.0
  %1311 = vmatpush.msra.mxu0 0.0
  %1312 = vmatpush.msra.mxu0 0.0
  %1313 = vmatpush.msra.mxu0 0.0
  %1314 = vmatpush.msra.mxu0 0.0
  %1315 = vmatpush.msra.mxu0 0.0
  %1316 = vmatpush.msra.mxu0 0.0
  %1317 = vmatpush.msra.mxu0 0.0
  %1318 = vmatpush.msra.mxu0 0.0
  %1319 = vmatpush.msra.mxu0 %v1297
  %1320 = vmatpush.msra.mxu0 %v1296
  %1321 = vmatpush.msra.mxu0 %v1295
  %1322 = vmatpush.msra.mxu0 %v1294
  %1323 = vmatmul.f32.gmra.mxu0 %v1305
  %v1324 = vpop.f32.mrf.mxu0
  %v1325 = vadd.f32 %v1300, %v1324
  %1326 = vdwg.mxu0
  %vm1327 = vcmask 31744
  %1328 = vst.msk [vmem:[%s9] sm:$0xff] %vm1327, %v1325
  // Predicated region
  $region38: #{lstm_model_forward.1} parent=0 // pred_check
    _
  $region39: #{lstm_model_forward.1} parent=0 // pred_check_branch
    %1330 = sbr.rel (0) target = $region41
  $region40: #{lstm_model_forward.1} parent=0 // pred_region
    _
  $region41: #{lstm_model_forward.1} parent=0 // pred_fallthru
    _
  // Predicated region
  $region42: #{lstm_model_forward.1} parent=0 // pred_check
    _
  $region43: #{lstm_model_forward.1} parent=0 // pred_check_branch
    %1332 = sbr.rel (0) target = $region45
  $region44: #{lstm_model_forward.1} parent=0 // pred_region
    _
  $region45: #{lstm_model_forward.1} parent=0 // pred_fallthru
    _

</llo_original>
